<compile_context>
chip_gen: v5e
topology: v5e:2x2
jax: 0.10.0
libtpu: 0.0.40
codegen_flags: <defaults>
</compile_context>

<pallas_src>
import jax
import jax.numpy as jnp
from jax.experimental import pallas as pl
from jax.experimental.pallas import tpu as pltpu


def vae_kernel(
    x_ref, eps_ref,
    w1_ref, b1_ref, w2_ref, b2_ref, w3_ref, b3_ref,
    w4_ref, b4_ref, w5_ref, b5_ref, w6_ref, b6_ref,
    recon_ref, ml_ref,
):
    latent_dim = eps_ref.shape[-1]

    # f32 -> bf16 cast happens in-kernel (no separate XLA convert pass / HBM round trip).
    x = x_ref[...].astype(jnp.bfloat16)

    # ---- encoder: bf16 MXU matmuls, f32 accumulation, f32 epilogue ----
    h = jnp.dot(x, w1_ref[...], preferred_element_type=jnp.float32) + b1_ref[...]
    h = jnp.maximum(h, 0.0).astype(jnp.bfloat16)
    h = jnp.dot(h, w2_ref[...], preferred_element_type=jnp.float32) + b2_ref[...]
    h = jnp.maximum(h, 0.0).astype(jnp.bfloat16)
    # fused mean||logvar projection, padded to a lane-dense width (multiple of 128)
    ml = jnp.dot(h, w3_ref[...], preferred_element_type=jnp.float32) + b3_ref[...]

    mean = ml[:, :latent_dim]
    logvar = ml[:, latent_dim:2 * latent_dim]

    # ---- reparameterize: z = mean + eps * exp(0.5 * logvar)  (all f32) ----
    std = jnp.exp(0.5 * logvar)
    z = (mean + eps_ref[...] * std).astype(jnp.bfloat16)

    # ---- decoder ----
    d = jnp.dot(z, w4_ref[...], preferred_element_type=jnp.float32) + b4_ref[...]
    d = jnp.maximum(d, 0.0).astype(jnp.bfloat16)
    d = jnp.dot(d, w5_ref[...], preferred_element_type=jnp.float32) + b5_ref[...]
    d = jnp.maximum(d, 0.0).astype(jnp.bfloat16)
    logits = jnp.dot(d, w6_ref[...], preferred_element_type=jnp.float32) + b6_ref[...]

    recon_ref[...] = jax.nn.sigmoid(logits).astype(recon_ref.dtype)
    ml_ref[...] = ml.astype(ml_ref.dtype)   # lane-dense mean||logvar slab


def _round_up(x, m):
    return ((x + m - 1) // m) * m


def _pick_tile_b(batch):
    # One big tile up to 512 rows: amortizes the fixed per-grid-step prologue and fills
    # the MXU M dimension on every generation (v5e/v6e are single-core: the grid is a
    # serial loop, so splitting a small batch is pure overhead).  Above 512 rows use
    # 512-row tiles (multiple of 256) so v7x's two TensorCores both get full MXU-M
    # passes via the "parallel" batch axis; the partial tail block is masked by Pallas.
    if batch <= 512:
        return batch
    return 512


@jax.jit
def vae_forward(x, eps, prepared_params):
    """x: [B, input_dim] f32, eps: [B, latent_dim] f32 -> (recon, mean, logvar) f32."""
    B, input_dim = x.shape
    latent_dim = eps.shape[1]
    (w1, b1, w2, b2, w3, b3, w4, b4, w5, b5, w6, b6) = prepared_params
    ml_dim = w3.shape[1]   # 2*latent padded up to a multiple of 128 lanes

    tile_b = _pick_tile_b(B)
    grid_b = pl.cdiv(B, tile_b)   # partial last block handled by Pallas OOB masking

    def batch_spec(feat):
        return pl.BlockSpec((tile_b, feat), lambda i: (i, 0))

    def const_spec(arr):
        # Constant index_map -> fetched once, resident in VMEM across the grid.
        return pl.BlockSpec(arr.shape, lambda i: (0, 0))

    weight_args = (w1, b1, w2, b2, w3, b3, w4, b4, w5, b5, w6, b6)

    layer_dims = (
        (input_dim, 512), (512, 256), (256, ml_dim),
        (latent_dim, 256), (256, 512), (512, input_dim),
    )
    flops = 2 * B * sum(di * do for di, do in layer_dims)
    transcendentals = B * (latent_dim + input_dim)   # exp(0.5*logvar) + sigmoid
    weight_bytes = sum(int(a.size) * a.dtype.itemsize for a in weight_args)
    bytes_accessed = (
        weight_bytes
        + int(x.size) * x.dtype.itemsize
        + int(eps.size) * eps.dtype.itemsize
        + B * (input_dim + ml_dim) * 4
    )

    # Honest VMEM budget: double-buffered batch tiles + resident (double-buffered)
    # weights + activation headroom, with a 16 MiB floor and a 32 MiB safe ceiling.
    tile_bytes = tile_b * 4 * (input_dim + latent_dim + input_dim + ml_dim)
    act_bytes = tile_b * 512 * 4 * 2
    vmem_limit = 2 * (2 * tile_bytes + 2 * weight_bytes + act_bytes)
    vmem_limit = int(min(max(vmem_limit, 16 * 1024 * 1024), 32 * 1024 * 1024))

    recon, ml = pl.pallas_call(
        vae_kernel,
        grid=(grid_b,),
        in_specs=[batch_spec(input_dim), batch_spec(latent_dim)]
        + [const_spec(a) for a in weight_args],
        out_specs=[
            batch_spec(input_dim),
            batch_spec(ml_dim),
        ],
        out_shape=[
            jax.ShapeDtypeStruct((B, input_dim), jnp.float32),
            jax.ShapeDtypeStruct((B, ml_dim), jnp.float32),
        ],
        compiler_params=pltpu.CompilerParams(
            dimension_semantics=("parallel",),
            vmem_limit_bytes=vmem_limit,
        ),
        cost_estimate=pl.CostEstimate(
            flops=flops,
            transcendentals=transcendentals,
            bytes_accessed=bytes_accessed,
        ),
    )(x, eps, *weight_args)

    mean = ml[:, :latent_dim]
    logvar = ml[:, latent_dim:2 * latent_dim]
    return recon, mean, logvar


def init_params(key, input_dim, latent_dim):
    """Deterministic f32 weight init. Weights stored [in, out]; biases [1, out]."""
    dims = [
        (input_dim, 512),
        (512, 256),
        (256, latent_dim * 2),
        (latent_dim, 256),
        (256, 512),
        (512, input_dim),
    ]
    params = []
    for (din, dout) in dims:
        key, kw, kb = jax.random.split(key, 3)
        bound = 1.0 / jnp.sqrt(din)  # matches nn.Linear default U(-1/sqrt(in), 1/sqrt(in))
        w = jax.random.uniform(kw, (din, dout), jnp.float32, -bound, bound)
        b = jax.random.uniform(kb, (1, dout), jnp.float32, -bound, bound)
        params += [w, b]
    return tuple(params)


def prepare_params(params, latent_dim):
    """One-time kernel-friendly prep: bf16 weights, f32 biases, and the mean||logvar
    projection (w3/b3) zero-padded from 2*latent to a multiple of 128 output columns."""
    (w1, b1, w2, b2, w3, b3, w4, b4, w5, b5, w6, b6) = params
    ml_dim = _round_up(2 * latent_dim, 128)
    pad = ml_dim - 2 * latent_dim
    w3p = jnp.pad(w3, ((0, 0), (0, pad)))
    b3p = jnp.pad(b3, ((0, 0), (0, pad)))
    ws = [w.astype(jnp.bfloat16) for w in (w1, w2, w3p, w4, w5, w6)]
    bs = [b.astype(jnp.float32) for b in (b1, b2, b3p, b4, b5, b6)]
    return (ws[0], bs[0], ws[1], bs[1], ws[2], bs[2],
            ws[3], bs[3], ws[4], bs[4], ws[5], bs[5])


def vae_reference(x, eps, params, latent_dim):
    """Plain-JAX reference mirroring the kernel's bf16-MXU / f32-epilogue numerics."""
    (w1, b1, w2, b2, w3, b3, w4, b4, w5, b5, w6, b6) = params

    def dot(a, w):
        return jnp.dot(a.astype(jnp.bfloat16), w.astype(jnp.bfloat16),
                       preferred_element_type=jnp.float32)

    h = jnp.maximum(dot(x, w1) + b1, 0.0)
    h = jnp.maximum(dot(h, w2) + b2, 0.0)
    ml = dot(h, w3) + b3
    mean, logvar = ml[:, :latent_dim], ml[:, latent_dim:]
    z = mean + eps * jnp.exp(0.5 * logvar)
    d = jnp.maximum(dot(z, w4) + b4, 0.0)
    d = jnp.maximum(dot(d, w5) + b5, 0.0)
    recon = jax.nn.sigmoid(dot(d, w6) + b6)
    return recon, mean, logvar


if __name__ == "__main__":
    input_dim = 256
    latent_dim = 32
    batch = 16

    key = jax.random.PRNGKey(0)
    k_params, k_x, k_eps = jax.random.split(key, 3)

    params = init_params(k_params, input_dim, latent_dim)
    prepped = prepare_params(params, latent_dim)   # one-time bf16 cast + lane padding

    x = jax.random.uniform(k_x, (batch, input_dim), jnp.float32)  # "image"-like data in [0,1]
    eps = jax.random.normal(k_eps, (batch, latent_dim), jnp.float32)

    recon, mean, logvar = vae_forward(x, eps, prepped)
    jax.block_until_ready((recon, mean, logvar))

    # correctness check against plain-JAX reference (bf16 weights => relaxed tolerance)
    r_ref, m_ref, lv_ref = vae_reference(x, eps, params, latent_dim)
    assert recon.shape == (batch, input_dim)
    assert mean.shape == (batch, latent_dim)
    assert logvar.shape == (batch, latent_dim)
    assert jnp.allclose(recon, r_ref, atol=5e-3, rtol=5e-3)
    assert jnp.allclose(mean, m_ref, atol=5e-3, rtol=5e-3)
    assert jnp.allclose(logvar, lv_ref, atol=5e-3, rtol=5e-3)

    # odd batch size (exercises the single full-batch-tile path, no alignment/pad needed)
    r13, m13, lv13 = vae_forward(x[:13], eps[:13], prepped)
    jax.block_until_ready((r13, m13, lv13))
    assert r13.shape == (13, input_dim) and m13.shape == (13, latent_dim)
    assert jnp.allclose(r13, r_ref[:13], atol=5e-3, rtol=5e-3)
    assert jnp.allclose(m13, m_ref[:13], atol=5e-3, rtol=5e-3)

    print("KERNEL_OK")
</pallas_src>

<mosaic_0001>
module attributes {stable_mosaic.version = 11 : i64} {
  func.func @vae_kernel(%arg0: i32, %arg1: memref<16x256xf32, #tpu.memory_space<vmem>>, %arg2: memref<16x32xf32, #tpu.memory_space<vmem>>, %arg3: memref<256x512xbf16, #tpu.memory_space<vmem>>, %arg4: memref<1x512xf32, #tpu.memory_space<vmem>>, %arg5: memref<512x256xbf16, #tpu.memory_space<vmem>>, %arg6: memref<1x256xf32, #tpu.memory_space<vmem>>, %arg7: memref<256x128xbf16, #tpu.memory_space<vmem>>, %arg8: memref<1x128xf32, #tpu.memory_space<vmem>>, %arg9: memref<32x256xbf16, #tpu.memory_space<vmem>>, %arg10: memref<1x256xf32, #tpu.memory_space<vmem>>, %arg11: memref<256x512xbf16, #tpu.memory_space<vmem>>, %arg12: memref<1x512xf32, #tpu.memory_space<vmem>>, %arg13: memref<512x256xbf16, #tpu.memory_space<vmem>>, %arg14: memref<1x256xf32, #tpu.memory_space<vmem>>, %arg15: memref<16x256xf32, #tpu.memory_space<vmem>>, %arg16: memref<16x128xf32, #tpu.memory_space<vmem>>) attributes {dimension_semantics = [#tpu.dimension_semantics<parallel>], iteration_bounds = array<i64: 1>, scalar_prefetch = 0 : i64, scratch_operands = 0 : i64, tpu.core_type = #tpu.core_type<tc>, window_params = [{transform_indices = @transform_0, window_bounds = array<i64: 16, 256>}, {transform_indices = @transform_1, window_bounds = array<i64: 16, 32>}, {pipeline_mode = #tpu.pipeline_mode<synchronous>, transform_indices = @transform_2, window_bounds = array<i64: 256, 512>}, {pipeline_mode = #tpu.pipeline_mode<synchronous>, transform_indices = @transform_3, window_bounds = array<i64: 1, 512>}, {pipeline_mode = #tpu.pipeline_mode<synchronous>, transform_indices = @transform_4, window_bounds = array<i64: 512, 256>}, {pipeline_mode = #tpu.pipeline_mode<synchronous>, transform_indices = @transform_5, window_bounds = array<i64: 1, 256>}, {pipeline_mode = #tpu.pipeline_mode<synchronous>, transform_indices = @transform_6, window_bounds = array<i64: 256, 128>}, {pipeline_mode = #tpu.pipeline_mode<synchronous>, transform_indices = @transform_7, window_bounds = array<i64: 1, 128>}, {pipeline_mode = #tpu.pipeline_mode<synchronous>, transform_indices = @transform_8, window_bounds = array<i64: 32, 256>}, {pipeline_mode = #tpu.pipeline_mode<synchronous>, transform_indices = @transform_9, window_bounds = array<i64: 1, 256>}, {pipeline_mode = #tpu.pipeline_mode<synchronous>, transform_indices = @transform_10, window_bounds = array<i64: 256, 512>}, {pipeline_mode = #tpu.pipeline_mode<synchronous>, transform_indices = @transform_11, window_bounds = array<i64: 1, 512>}, {pipeline_mode = #tpu.pipeline_mode<synchronous>, transform_indices = @transform_12, window_bounds = array<i64: 512, 256>}, {pipeline_mode = #tpu.pipeline_mode<synchronous>, transform_indices = @transform_13, window_bounds = array<i64: 1, 256>}, {transform_indices = @transform_14, window_bounds = array<i64: 16, 256>}, {transform_indices = @transform_15, window_bounds = array<i64: 16, 128>}]} {
    %c0 = arith.constant 0 : index
    %c0_0 = arith.constant 0 : index
    %0 = vector.load %arg1[%c0, %c0_0] : memref<16x256xf32, #tpu.memory_space<vmem>>, vector<16x256xf32>
    %1 = arith.truncf %0 : vector<16x256xf32> to vector<16x256xbf16>
    %c0_1 = arith.constant 0 : index
    %c0_2 = arith.constant 0 : index
    %2 = vector.load %arg3[%c0_1, %c0_2] : memref<256x512xbf16, #tpu.memory_space<vmem>>, vector<256x512xbf16>
    %cst = arith.constant dense<0.000000e+00> : vector<16x512xf32>
    %3 = tpu.matmul %1, %2, %cst {dimension_numbers = #tpu.dot_dimension_numbers<[1], [0], [0], [1], [0, 0, 1, 1], [], []>} : vector<16x256xbf16>, vector<256x512xbf16>, vector<16x512xf32> -> vector<16x512xf32>
    %c0_3 = arith.constant 0 : index
    %c0_4 = arith.constant 0 : index
    %4 = vector.load %arg4[%c0_3, %c0_4] : memref<1x512xf32, #tpu.memory_space<vmem>>, vector<1x512xf32>
    %5 = vector.broadcast %4 : vector<1x512xf32> to vector<16x512xf32>
    %6 = arith.addf %3, %5 : vector<16x512xf32>
    %cst_5 = arith.constant 0.000000e+00 : f32
    %7 = vector.broadcast %cst_5 : f32 to vector<16x512xf32>
    %8 = arith.maximumf %6, %7 : vector<16x512xf32>
    %9 = arith.truncf %8 : vector<16x512xf32> to vector<16x512xbf16>
    %c0_6 = arith.constant 0 : index
    %c0_7 = arith.constant 0 : index
    %10 = vector.load %arg5[%c0_6, %c0_7] : memref<512x256xbf16, #tpu.memory_space<vmem>>, vector<512x256xbf16>
    %cst_8 = arith.constant dense<0.000000e+00> : vector<16x256xf32>
    %11 = tpu.matmul %9, %10, %cst_8 {dimension_numbers = #tpu.dot_dimension_numbers<[1], [0], [0], [1], [0, 0, 1, 1], [], []>} : vector<16x512xbf16>, vector<512x256xbf16>, vector<16x256xf32> -> vector<16x256xf32>
    %c0_9 = arith.constant 0 : index
    %c0_10 = arith.constant 0 : index
    %12 = vector.load %arg6[%c0_9, %c0_10] : memref<1x256xf32, #tpu.memory_space<vmem>>, vector<1x256xf32>
    %13 = vector.broadcast %12 : vector<1x256xf32> to vector<16x256xf32>
    %14 = arith.addf %11, %13 : vector<16x256xf32>
    %cst_11 = arith.constant 0.000000e+00 : f32
    %15 = vector.broadcast %cst_11 : f32 to vector<16x256xf32>
    %16 = arith.maximumf %14, %15 : vector<16x256xf32>
    %17 = arith.truncf %16 : vector<16x256xf32> to vector<16x256xbf16>
    %c0_12 = arith.constant 0 : index
    %c0_13 = arith.constant 0 : index
    %18 = vector.load %arg7[%c0_12, %c0_13] : memref<256x128xbf16, #tpu.memory_space<vmem>>, vector<256x128xbf16>
    %cst_14 = arith.constant dense<0.000000e+00> : vector<16x128xf32>
    %19 = tpu.matmul %17, %18, %cst_14 {dimension_numbers = #tpu.dot_dimension_numbers<[1], [0], [0], [1], [0, 0, 1, 1], [], []>} : vector<16x256xbf16>, vector<256x128xbf16>, vector<16x128xf32> -> vector<16x128xf32>
    %c0_15 = arith.constant 0 : index
    %c0_16 = arith.constant 0 : index
    %20 = vector.load %arg8[%c0_15, %c0_16] : memref<1x128xf32, #tpu.memory_space<vmem>>, vector<1x128xf32>
    %21 = vector.broadcast %20 : vector<1x128xf32> to vector<16x128xf32>
    %22 = arith.addf %19, %21 : vector<16x128xf32>
    %23 = vector.extract_strided_slice %22 {offsets = [0, 0], sizes = [16, 32], strides = [1, 1]} : vector<16x128xf32> to vector<16x32xf32>
    %24 = vector.extract_strided_slice %22 {offsets = [0, 32], sizes = [16, 32], strides = [1, 1]} : vector<16x128xf32> to vector<16x32xf32>
    %cst_17 = arith.constant 5.000000e-01 : f32
    %25 = vector.broadcast %cst_17 : f32 to vector<16x32xf32>
    %26 = arith.mulf %25, %24 : vector<16x32xf32>
    %27 = math.exp %26 : vector<16x32xf32>
    %c0_18 = arith.constant 0 : index
    %c0_19 = arith.constant 0 : index
    %28 = vector.load %arg2[%c0_18, %c0_19] : memref<16x32xf32, #tpu.memory_space<vmem>>, vector<16x32xf32>
    %29 = arith.mulf %28, %27 : vector<16x32xf32>
    %30 = arith.addf %23, %29 : vector<16x32xf32>
    %31 = arith.truncf %30 : vector<16x32xf32> to vector<16x32xbf16>
    %c0_20 = arith.constant 0 : index
    %c0_21 = arith.constant 0 : index
    %32 = vector.load %arg9[%c0_20, %c0_21] : memref<32x256xbf16, #tpu.memory_space<vmem>>, vector<32x256xbf16>
    %cst_22 = arith.constant dense<0.000000e+00> : vector<16x256xf32>
    %33 = tpu.matmul %31, %32, %cst_22 {dimension_numbers = #tpu.dot_dimension_numbers<[1], [0], [0], [1], [0, 0, 1, 1], [], []>} : vector<16x32xbf16>, vector<32x256xbf16>, vector<16x256xf32> -> vector<16x256xf32>
    %c0_23 = arith.constant 0 : index
    %c0_24 = arith.constant 0 : index
    %34 = vector.load %arg10[%c0_23, %c0_24] : memref<1x256xf32, #tpu.memory_space<vmem>>, vector<1x256xf32>
    %35 = vector.broadcast %34 : vector<1x256xf32> to vector<16x256xf32>
    %36 = arith.addf %33, %35 : vector<16x256xf32>
    %cst_25 = arith.constant 0.000000e+00 : f32
    %37 = vector.broadcast %cst_25 : f32 to vector<16x256xf32>
    %38 = arith.maximumf %36, %37 : vector<16x256xf32>
    %39 = arith.truncf %38 : vector<16x256xf32> to vector<16x256xbf16>
    %c0_26 = arith.constant 0 : index
    %c0_27 = arith.constant 0 : index
    %40 = vector.load %arg11[%c0_26, %c0_27] : memref<256x512xbf16, #tpu.memory_space<vmem>>, vector<256x512xbf16>
    %cst_28 = arith.constant dense<0.000000e+00> : vector<16x512xf32>
    %41 = tpu.matmul %39, %40, %cst_28 {dimension_numbers = #tpu.dot_dimension_numbers<[1], [0], [0], [1], [0, 0, 1, 1], [], []>} : vector<16x256xbf16>, vector<256x512xbf16>, vector<16x512xf32> -> vector<16x512xf32>
    %c0_29 = arith.constant 0 : index
    %c0_30 = arith.constant 0 : index
    %42 = vector.load %arg12[%c0_29, %c0_30] : memref<1x512xf32, #tpu.memory_space<vmem>>, vector<1x512xf32>
    %43 = vector.broadcast %42 : vector<1x512xf32> to vector<16x512xf32>
    %44 = arith.addf %41, %43 : vector<16x512xf32>
    %cst_31 = arith.constant 0.000000e+00 : f32
    %45 = vector.broadcast %cst_31 : f32 to vector<16x512xf32>
    %46 = arith.maximumf %44, %45 : vector<16x512xf32>
    %47 = arith.truncf %46 : vector<16x512xf32> to vector<16x512xbf16>
    %c0_32 = arith.constant 0 : index
    %c0_33 = arith.constant 0 : index
    %48 = vector.load %arg13[%c0_32, %c0_33] : memref<512x256xbf16, #tpu.memory_space<vmem>>, vector<512x256xbf16>
    %cst_34 = arith.constant dense<0.000000e+00> : vector<16x256xf32>
    %49 = tpu.matmul %47, %48, %cst_34 {dimension_numbers = #tpu.dot_dimension_numbers<[1], [0], [0], [1], [0, 0, 1, 1], [], []>} : vector<16x512xbf16>, vector<512x256xbf16>, vector<16x256xf32> -> vector<16x256xf32>
    %c0_35 = arith.constant 0 : index
    %c0_36 = arith.constant 0 : index
    %50 = vector.load %arg14[%c0_35, %c0_36] : memref<1x256xf32, #tpu.memory_space<vmem>>, vector<1x256xf32>
    %51 = vector.broadcast %50 : vector<1x256xf32> to vector<16x256xf32>
    %52 = arith.addf %49, %51 : vector<16x256xf32>
    %53 = arith.negf %52 : vector<16x256xf32>
    %54 = math.exp %53 : vector<16x256xf32>
    %cst_37 = arith.constant 1.000000e+00 : f32
    %55 = vector.broadcast %cst_37 : f32 to vector<16x256xf32>
    %56 = arith.addf %55, %54 : vector<16x256xf32>
    %57 = arith.divf %55, %56 : vector<16x256xf32>
    %c0_38 = arith.constant 0 : index
    %c0_39 = arith.constant 0 : index
    %58 = vector.load %arg15[%c0_38, %c0_39] : memref<16x256xf32, #tpu.memory_space<vmem>>, vector<16x256xf32>
    tpu.vector_store %arg15[%c0_38, %c0_39], %57 {strides = array<i32>} : memref<16x256xf32, #tpu.memory_space<vmem>>, vector<16x256xf32>,
    %c0_40 = arith.constant 0 : index
    %c0_41 = arith.constant 0 : index
    %59 = vector.load %arg16[%c0_40, %c0_41] : memref<16x128xf32, #tpu.memory_space<vmem>>, vector<16x128xf32>
    tpu.vector_store %arg16[%c0_40, %c0_41], %22 {strides = array<i32>} : memref<16x128xf32, #tpu.memory_space<vmem>>, vector<16x128xf32>,
    return
  }
  func.func @transform_0(%arg0: i32) -> (i32, i32) {
    %c0_i32 = arith.constant 0 : i32
    %c0_i32_0 = arith.constant 0 : i32
    return %arg0, %c0_i32 : i32, i32
  }
  func.func @transform_1(%arg0: i32) -> (i32, i32) {
    %c0_i32 = arith.constant 0 : i32
    %c0_i32_0 = arith.constant 0 : i32
    return %arg0, %c0_i32 : i32, i32
  }
  func.func @transform_2(%arg0: i32) -> (i32, i32) {
    %c0_i32 = arith.constant 0 : i32
    %c0_i32_0 = arith.constant 0 : i32
    %c0_i32_1 = arith.constant 0 : i32
    return %c0_i32, %c0_i32_0 : i32, i32
  }
  func.func @transform_3(%arg0: i32) -> (i32, i32) {
    %c0_i32 = arith.constant 0 : i32
    %c0_i32_0 = arith.constant 0 : i32
    %c0_i32_1 = arith.constant 0 : i32
    return %c0_i32, %c0_i32_0 : i32, i32
  }
  func.func @transform_4(%arg0: i32) -> (i32, i32) {
    %c0_i32 = arith.constant 0 : i32
    %c0_i32_0 = arith.constant 0 : i32
    %c0_i32_1 = arith.constant 0 : i32
    return %c0_i32, %c0_i32_0 : i32, i32
  }
  func.func @transform_5(%arg0: i32) -> (i32, i32) {
    %c0_i32 = arith.constant 0 : i32
    %c0_i32_0 = arith.constant 0 : i32
    %c0_i32_1 = arith.constant 0 : i32
    return %c0_i32, %c0_i32_0 : i32, i32
  }
  func.func @transform_6(%arg0: i32) -> (i32, i32) {
    %c0_i32 = arith.constant 0 : i32
    %c0_i32_0 = arith.constant 0 : i32
    %c0_i32_1 = arith.constant 0 : i32
    return %c0_i32, %c0_i32_0 : i32, i32
  }
  func.func @transform_7(%arg0: i32) -> (i32, i32) {
    %c0_i32 = arith.constant 0 : i32
    %c0_i32_0 = arith.constant 0 : i32
    %c0_i32_1 = arith.constant 0 : i32
    return %c0_i32, %c0_i32_0 : i32, i32
  }
  func.func @transform_8(%arg0: i32) -> (i32, i32) {
    %c0_i32 = arith.constant 0 : i32
    %c0_i32_0 = arith.constant 0 : i32
    %c0_i32_1 = arith.constant 0 : i32
    return %c0_i32, %c0_i32_0 : i32, i32
  }
  func.func @transform_9(%arg0: i32) -> (i32, i32) {
    %c0_i32 = arith.constant 0 : i32
    %c0_i32_0 = arith.constant 0 : i32
    %c0_i32_1 = arith.constant 0 : i32
    return %c0_i32, %c0_i32_0 : i32, i32
  }
  func.func @transform_10(%arg0: i32) -> (i32, i32) {
    %c0_i32 = arith.constant 0 : i32
    %c0_i32_0 = arith.constant 0 : i32
    %c0_i32_1 = arith.constant 0 : i32
    return %c0_i32, %c0_i32_0 : i32, i32
  }
  func.func @transform_11(%arg0: i32) -> (i32, i32) {
    %c0_i32 = arith.constant 0 : i32
    %c0_i32_0 = arith.constant 0 : i32
    %c0_i32_1 = arith.constant 0 : i32
    return %c0_i32, %c0_i32_0 : i32, i32
  }
  func.func @transform_12(%arg0: i32) -> (i32, i32) {
    %c0_i32 = arith.constant 0 : i32
    %c0_i32_0 = arith.constant 0 : i32
    %c0_i32_1 = arith.constant 0 : i32
    return %c0_i32, %c0_i32_0 : i32, i32
  }
  func.func @transform_13(%arg0: i32) -> (i32, i32) {
    %c0_i32 = arith.constant 0 : i32
    %c0_i32_0 = arith.constant 0 : i32
    %c0_i32_1 = arith.constant 0 : i32
    return %c0_i32, %c0_i32_0 : i32, i32
  }
  func.func @transform_14(%arg0: i32) -> (i32, i32) {
    %c0_i32 = arith.constant 0 : i32
    %c0_i32_0 = arith.constant 0 : i32
    return %arg0, %c0_i32 : i32, i32
  }
  func.func @transform_15(%arg0: i32) -> (i32, i32) {
    %c0_i32 = arith.constant 0 : i32
    %c0_i32_0 = arith.constant 0 : i32
    return %arg0, %c0_i32 : i32, i32
  }
}

</mosaic_0001>

<llo_original>
// kernel: vae_forward.1
$region0: #{vae_forward.1}
  #allocation0 [shape = 'u32[]', space=smem, size = 0x4, offset = 0x4, fixed_abs, tag = 'smem constant byte address 0x4 - core index']
  #allocation1 [shape = 'u32[72,128]{1,0:T(1,128)}', space=vmem, size = 0x9000, scoped, tag = 'internal scratch']
  %s0 = inlined_call_operand.hbm [shape: f32[16,256], index: 0, kind: input, shape index: {}]
  %s1 = inlined_call_operand.hbm [shape: f32[16,32], index: 1, kind: input, shape index: {}]
  %s2 = inlined_call_operand.hbm [shape: bf16[256,512], index: 2, kind: input, shape index: {}]
  %s3 = inlined_call_operand.hbm [shape: f32[1,512], index: 3, kind: input, shape index: {}]
  %s4 = inlined_call_operand.hbm [shape: bf16[512,256], index: 4, kind: input, shape index: {}]
  %s5 = inlined_call_operand.vmem [shape: f32[1,256], index: 5, kind: input, shape index: {}]
  %s6 = inlined_call_operand.hbm [shape: bf16[256,128], index: 6, kind: input, shape index: {}]
  %s7 = inlined_call_operand.hbm [shape: f32[1,128], index: 7, kind: input, shape index: {}]
  %s8 = inlined_call_operand.hbm [shape: bf16[32,256], index: 8, kind: input, shape index: {}]
  %s9 = inlined_call_operand.vmem [shape: f32[1,256], index: 9, kind: input, shape index: {}]
  %s10 = inlined_call_operand.hbm [shape: bf16[256,512], index: 10, kind: input, shape index: {}]
  %s11 = inlined_call_operand.vmem [shape: f32[1,512], index: 11, kind: input, shape index: {}]
  %s12 = inlined_call_operand.hbm [shape: bf16[512,256], index: 12, kind: input, shape index: {}]
  %s13 = inlined_call_operand.vmem [shape: f32[1,256], index: 13, kind: input, shape index: {}]
  %s14 = inlined_call_operand.hbm [shape: f32[16,256], index: 14, kind: output, shape index: {0}]
  %s15 = inlined_call_operand.vmem [shape: f32[16,128], index: 15, kind: output, shape index: {1}]
  %16 = xla_tuple %s14, %s15
  %s17 = sld [smem:[#allocation0]]
  $region114: #{vae_forward.1} parent=0
    _
  %s19 = ssub.s32 1, %s17
  %s20 = scalar_select 0, %s19, %s17
  $region1: #{vae_forward.1} parent=0
    #allocation2 [shape = 'u8[16384]{0}', space=vmem, size = 0x4000, scoped, tag = 'input window, operand 0, single buffered']
    #allocation3 [shape = 's32[1]{0}', space=sflag, size = 0x4, scoped, tag = 'scoped memory for vae_forward.1']
    #allocation4 [shape = 's32[1]{0}', space=sflag, size = 0x4, scoped, tag = 'scoped memory for vae_forward.1']
    #allocation5 [shape = 'u8[8192]{0}', space=vmem, size = 0x2000, scoped, tag = 'input window, operand 1, single buffered']
    #allocation6 [shape = 's32[1]{0}', space=sflag, size = 0x4, scoped, tag = 'scoped memory for vae_forward.1']
    #allocation7 [shape = 'u8[262144]{0}', space=vmem, size = 0x40000, scoped, tag = 'input window, operand 2, single buffered']
    #allocation8 [shape = 'u8[2048]{0}', space=vmem, size = 0x800, scoped, tag = 'input window, operand 3, single buffered']
    #allocation9 [shape = 's32[1]{0}', space=sflag, size = 0x4, scoped, tag = 'scoped memory for vae_forward.1']
    #allocation10 [shape = 'u8[262144]{0}', space=vmem, size = 0x40000, scoped, tag = 'input window, operand 4, single buffered']
    #allocation11 [shape = 'u8[65536]{0}', space=vmem, size = 0x10000, scoped, tag = 'input window, operand 6, single buffered']
    #allocation12 [shape = 's32[1]{0}', space=sflag, size = 0x4, scoped, tag = 'scoped memory for vae_forward.1']
    #allocation13 [shape = 'u8[512]{0}', space=vmem, size = 0x400, scoped, tag = 'input window, operand 7, single buffered']
    #allocation14 [shape = 'u8[16384]{0}', space=vmem, size = 0x4000, scoped, tag = 'input window, operand 8, single buffered']
    #allocation15 [shape = 's32[1]{0}', space=sflag, size = 0x4, scoped, tag = 'scoped memory for vae_forward.1']
    #allocation16 [shape = 'u8[262144]{0}', space=vmem, size = 0x40000, scoped, tag = 'input window, operand 10, single buffered']
    #allocation17 [shape = 'u8[262144]{0}', space=vmem, size = 0x40000, scoped, tag = 'input window, operand 12, single buffered']
    #allocation18 [shape = 's32[1]{0}', space=sflag, size = 0x4, scoped, tag = 'scoped memory for vae_forward.1']
    #allocation19 [shape = 'u8[16384]{0}', space=vmem, size = 0x4000, scoped, tag = 'output window, operand 0, single buffered']
    %21 = vsyncpa [#allocation3], 0
    %22 = vsyncpa [#allocation6], 0
    %23 = vsyncpa [#allocation9], 0
    %24 = vsyncpa [#allocation12], 0
    %25 = vsyncpa [#allocation15], 0
    %26 = vsyncpa [#allocation18], 0
    %27 = vsyncpa [#allocation4], 0
    // Predicated region
    $region2: #{vae_forward.1} parent=1 // pred_check
      _
    $region3: #{vae_forward.1} parent=1 // pred_check_branch
      %29 = sbr.rel (0) target = $region5
    $region4: #{vae_forward.1} parent=1 // pred_region
      %31 = vsyncadd [#allocation3], 0
      %s32 = sshll.u32 %s0, 4
      %s33 = int_to_ptr.hbm [resolvable:$true] %s32
      %s34 = sshll.u32 [#allocation2], 4
      %s35 = int_to_ptr.vmem [resolvable:$true] %s34
      %40 = dma.hbm_to_vmem [thread:$0]  %s33, 512, %s35, [#allocation3], 256, 256, 16
    $region5: #{vae_forward.1} parent=1 // pred_fallthru
      _
    // Predicated region
    $region6: #{vae_forward.1} parent=1 // pred_check
      _
    $region7: #{vae_forward.1} parent=1 // pred_check_branch
      %42 = sbr.rel (0) target = $region9
    $region8: #{vae_forward.1} parent=1 // pred_region
      %44 = vsyncadd [#allocation6], 0
      %s45 = sshll.u32 %s1, 4
      %s46 = int_to_ptr.hbm [resolvable:$true] %s45
      %s47 = sshll.u32 [#allocation5], 4
      %s48 = int_to_ptr.vmem [resolvable:$true] %s47
      %53 = dma.hbm_to_vmem [thread:$0]  %s46, 256, %s48, [#allocation6], 128, 128, 8
    $region9: #{vae_forward.1} parent=1 // pred_fallthru
      _
    // Predicated region
    $region10: #{vae_forward.1} parent=1 // pred_check
      _
    $region11: #{vae_forward.1} parent=1 // pred_check_branch
      %55 = sbr.rel (0) target = $region13
    $region12: #{vae_forward.1} parent=1 // pred_region
      %57 = vsyncadd [#allocation6], 0
      %s58 = sshll.u32 %s2, 4
      %s59 = int_to_ptr.hbm [resolvable:$true] %s58
      %s60 = sshll.u32 [#allocation7], 4
      %s61 = int_to_ptr.vmem [resolvable:$true] %s60
      %66 = dma.hbm_to_vmem [thread:$0]  %s59, 8192, %s61, [#allocation6], 256, 256, 16
    $region13: #{vae_forward.1} parent=1 // pred_fallthru
      _
    // Predicated region
    $region14: #{vae_forward.1} parent=1 // pred_check
      _
    $region15: #{vae_forward.1} parent=1 // pred_check_branch
      %68 = sbr.rel (0) target = $region17
    $region16: #{vae_forward.1} parent=1 // pred_region
      %70 = vsyncadd [#allocation9], 0
      %s72 = sshll.u32 %s3, 4
      %s73 = int_to_ptr.hbm [resolvable:$true] %s72
      %s74 = sshll.u32 [#allocation8], 4
      %s75 = int_to_ptr.vmem [resolvable:$true] %s74
      %77 = dma.hbm_to_vmem [thread:$0]  %s73, 64, %s75, [#allocation9]
    $region17: #{vae_forward.1} parent=1 // pred_fallthru
      _
    // Predicated region
    $region18: #{vae_forward.1} parent=1 // pred_check
      _
    $region19: #{vae_forward.1} parent=1 // pred_check_branch
      %79 = sbr.rel (0) target = $region21
    $region20: #{vae_forward.1} parent=1 // pred_region
      %81 = vsyncadd [#allocation9], 0
      %s82 = sshll.u32 %s4, 4
      %s83 = int_to_ptr.hbm [resolvable:$true] %s82
      %s84 = sshll.u32 [#allocation10], 4
      %s85 = int_to_ptr.vmem [resolvable:$true] %s84
      %90 = dma.hbm_to_vmem [thread:$0]  %s83, 8192, %s85, [#allocation9], 128, 128, 8
    $region21: #{vae_forward.1} parent=1 // pred_fallthru
      _
    // Predicated region
    $region22: #{vae_forward.1} parent=1 // pred_check
      _
    $region23: #{vae_forward.1} parent=1 // pred_check_branch
      %92 = sbr.rel (0) target = $region25
    $region24: #{vae_forward.1} parent=1 // pred_region
      _
    $region25: #{vae_forward.1} parent=1 // pred_fallthru
      _
    // Predicated region
    $region26: #{vae_forward.1} parent=1 // pred_check
      _
    $region27: #{vae_forward.1} parent=1 // pred_check_branch
      %94 = sbr.rel (0) target = $region29
    $region28: #{vae_forward.1} parent=1 // pred_region
      %96 = vsyncadd [#allocation12], 0
      %s97 = sshll.u32 %s6, 4
      %s98 = int_to_ptr.hbm [resolvable:$true] %s97
      %s99 = sshll.u32 [#allocation11], 4
      %s100 = int_to_ptr.vmem [resolvable:$true] %s99
      %105 = dma.hbm_to_vmem [thread:$0]  %s98, 2048, %s100, [#allocation12], 64, 64, 4
    $region29: #{vae_forward.1} parent=1 // pred_fallthru
      _
    // Predicated region
    $region30: #{vae_forward.1} parent=1 // pred_check
      _
    $region31: #{vae_forward.1} parent=1 // pred_check_branch
      %107 = sbr.rel (0) target = $region33
    $region32: #{vae_forward.1} parent=1 // pred_region
      %109 = vsyncadd [#allocation12], 0
      %s111 = sshll.u32 %s7, 4
      %s112 = int_to_ptr.hbm [resolvable:$true] %s111
      %s113 = sshll.u32 [#allocation13], 4
      %s114 = int_to_ptr.vmem [resolvable:$true] %s113
      %116 = dma.hbm_to_vmem [thread:$0]  %s112, 16, %s114, [#allocation12]
    $region33: #{vae_forward.1} parent=1 // pred_fallthru
      _
    // Predicated region
    $region34: #{vae_forward.1} parent=1 // pred_check
      _
    $region35: #{vae_forward.1} parent=1 // pred_check_branch
      %118 = sbr.rel (0) target = $region37
    $region36: #{vae_forward.1} parent=1 // pred_region
      %120 = vsyncadd [#allocation15], 0
      %s121 = sshll.u32 %s8, 4
      %s122 = int_to_ptr.hbm [resolvable:$true] %s121
      %s123 = sshll.u32 [#allocation14], 4
      %s124 = int_to_ptr.vmem [resolvable:$true] %s123
      %129 = dma.hbm_to_vmem [thread:$0]  %s122, 512, %s124, [#allocation15], 128, 128, 8
    $region37: #{vae_forward.1} parent=1 // pred_fallthru
      _
    // Predicated region
    $region38: #{vae_forward.1} parent=1 // pred_check
      _
    $region39: #{vae_forward.1} parent=1 // pred_check_branch
      %131 = sbr.rel (0) target = $region41
    $region40: #{vae_forward.1} parent=1 // pred_region
      _
    $region41: #{vae_forward.1} parent=1 // pred_fallthru
      _
    // Predicated region
    $region42: #{vae_forward.1} parent=1 // pred_check
      _
    $region43: #{vae_forward.1} parent=1 // pred_check_branch
      %133 = sbr.rel (0) target = $region45
    $region44: #{vae_forward.1} parent=1 // pred_region
      %135 = vsyncadd [#allocation15], 0
      %s136 = sshll.u32 %s10, 4
      %s137 = int_to_ptr.hbm [resolvable:$true] %s136
      %s138 = sshll.u32 [#allocation16], 4
      %s139 = int_to_ptr.vmem [resolvable:$true] %s138
      %144 = dma.hbm_to_vmem [thread:$0]  %s137, 8192, %s139, [#allocation15], 256, 256, 16
    $region45: #{vae_forward.1} parent=1 // pred_fallthru
      _
    // Predicated region
    $region46: #{vae_forward.1} parent=1 // pred_check
      _
    $region47: #{vae_forward.1} parent=1 // pred_check_branch
      %146 = sbr.rel (0) target = $region49
    $region48: #{vae_forward.1} parent=1 // pred_region
      _
    $region49: #{vae_forward.1} parent=1 // pred_fallthru
      _
    // Predicated region
    $region50: #{vae_forward.1} parent=1 // pred_check
      _
    $region51: #{vae_forward.1} parent=1 // pred_check_branch
      %148 = sbr.rel (0) target = $region53
    $region52: #{vae_forward.1} parent=1 // pred_region
      %150 = vsyncadd [#allocation18], 0
      %s151 = sshll.u32 %s12, 4
      %s152 = int_to_ptr.hbm [resolvable:$true] %s151
      %s153 = sshll.u32 [#allocation17], 4
      %s154 = int_to_ptr.vmem [resolvable:$true] %s153
      %159 = dma.hbm_to_vmem [thread:$0]  %s152, 8192, %s154, [#allocation18], 128, 128, 8
    $region53: #{vae_forward.1} parent=1 // pred_fallthru
      _
    // Predicated region
    $region54: #{vae_forward.1} parent=1 // pred_check
      _
    $region55: #{vae_forward.1} parent=1 // pred_check_branch
      %161 = sbr.rel (0) target = $region57
    $region56: #{vae_forward.1} parent=1 // pred_region
      _
    $region57: #{vae_forward.1} parent=1 // pred_fallthru
      _
    // Predicated region
    $region58: #{vae_forward.1} parent=1 // pred_check
      _
    $region59: #{vae_forward.1} parent=1 // pred_check_branch
      %163 = sbr.rel (0) target = $region61
    $region60: #{vae_forward.1} parent=1 // pred_region
      %165 = dma.done [#allocation3], 512
    $region61: #{vae_forward.1} parent=1 // pred_fallthru
      _
    // Predicated region
    $region62: #{vae_forward.1} parent=1 // pred_check
      _
    $region63: #{vae_forward.1} parent=1 // pred_check_branch
      %167 = sbr.rel (0) target = $region65
    $region64: #{vae_forward.1} parent=1 // pred_region
      %169 = dma.done [#allocation6], 256
    $region65: #{vae_forward.1} parent=1 // pred_fallthru
      _
    // Predicated region
    $region66: #{vae_forward.1} parent=1 // pred_check
      _
    $region67: #{vae_forward.1} parent=1 // pred_check_branch
      %171 = sbr.rel (0) target = $region69
    $region68: #{vae_forward.1} parent=1 // pred_region
      %173 = dma.done [#allocation6], 8192
    $region69: #{vae_forward.1} parent=1 // pred_fallthru
      _
    // Predicated region
    $region70: #{vae_forward.1} parent=1 // pred_check
      _
    $region71: #{vae_forward.1} parent=1 // pred_check_branch
      %175 = sbr.rel (0) target = $region73
    $region72: #{vae_forward.1} parent=1 // pred_region
      %177 = dma.done [#allocation9], 64
    $region73: #{vae_forward.1} parent=1 // pred_fallthru
      _
    // Predicated region
    $region74: #{vae_forward.1} parent=1 // pred_check
      _
    $region75: #{vae_forward.1} parent=1 // pred_check_branch
      %179 = sbr.rel (0) target = $region77
    $region76: #{vae_forward.1} parent=1 // pred_region
      %181 = dma.done [#allocation9], 8192
    $region77: #{vae_forward.1} parent=1 // pred_fallthru
      _
    // Predicated region
    $region78: #{vae_forward.1} parent=1 // pred_check
      _
    $region79: #{vae_forward.1} parent=1 // pred_check_branch
      %183 = sbr.rel (0) target = $region81
    $region80: #{vae_forward.1} parent=1 // pred_region
      %185 = dma.done [#allocation12], 2048
    $region81: #{vae_forward.1} parent=1 // pred_fallthru
      _
    // Predicated region
    $region82: #{vae_forward.1} parent=1 // pred_check
      _
    $region83: #{vae_forward.1} parent=1 // pred_check_branch
      %187 = sbr.rel (0) target = $region85
    $region84: #{vae_forward.1} parent=1 // pred_region
      %189 = dma.done [#allocation12], 16
    $region85: #{vae_forward.1} parent=1 // pred_fallthru
      _
    // Predicated region
    $region86: #{vae_forward.1} parent=1 // pred_check
      _
    $region87: #{vae_forward.1} parent=1 // pred_check_branch
      %191 = sbr.rel (0) target = $region89
    $region88: #{vae_forward.1} parent=1 // pred_region
      %193 = dma.done [#allocation15], 512
    $region89: #{vae_forward.1} parent=1 // pred_fallthru
      _
    // Predicated region
    $region90: #{vae_forward.1} parent=1 // pred_check
      _
    $region91: #{vae_forward.1} parent=1 // pred_check_branch
      %195 = sbr.rel (0) target = $region93
    $region92: #{vae_forward.1} parent=1 // pred_region
      %197 = dma.done [#allocation15], 8192
    $region93: #{vae_forward.1} parent=1 // pred_fallthru
      _
    // Predicated region
    $region94: #{vae_forward.1} parent=1 // pred_check
      _
    $region95: #{vae_forward.1} parent=1 // pred_check_branch
      %199 = sbr.rel (0) target = $region97
    $region96: #{vae_forward.1} parent=1 // pred_region
      %201 = dma.done [#allocation18], 8192
    $region97: #{vae_forward.1} parent=1 // pred_fallthru
      _
    %v203 = vld [vmem:[#allocation2] sm:$0xff]
    %v204 = vld [vmem:[#allocation2 + $0x8] sm:$0xff]
    %v205 = vld [vmem:[#allocation2 + $0x10] sm:$0xff]
    %v206 = vld [vmem:[#allocation2 + $0x18] sm:$0xff]
    %v207 = vpack.c.bf16 %v205, %v203
    %v208 = vpack.c.bf16 %v206, %v204
    %v209 = vld [vmem:[#allocation7] sm:$0xff]
    %v210 = vld [vmem:[#allocation7 + $0x8] sm:$0xff]
    %v211 = vld [vmem:[#allocation7 + $0x10] sm:$0xff]
    %v212 = vld [vmem:[#allocation7 + $0x18] sm:$0xff]
    %v213 = vld [vmem:[#allocation7 + $0x20] sm:$0xff]
    %v214 = vld [vmem:[#allocation7 + $0x28] sm:$0xff]
    %v215 = vld [vmem:[#allocation7 + $0x30] sm:$0xff]
    %v216 = vld [vmem:[#allocation7 + $0x38] sm:$0xff]
    %v217 = vld [vmem:[#allocation7 + $0x40] sm:$0xff]
    %v218 = vld [vmem:[#allocation7 + $0x48] sm:$0xff]
    %v219 = vld [vmem:[#allocation7 + $0x50] sm:$0xff]
    %v220 = vld [vmem:[#allocation7 + $0x58] sm:$0xff]
    %v221 = vld [vmem:[#allocation7 + $0x60] sm:$0xff]
    %v222 = vld [vmem:[#allocation7 + $0x68] sm:$0xff]
    %v223 = vld [vmem:[#allocation7 + $0x70] sm:$0xff]
    %v224 = vld [vmem:[#allocation7 + $0x78] sm:$0xff]
    %v225 = vld [vmem:[#allocation7 + $0x80] sm:$0xff]
    %v226 = vld [vmem:[#allocation7 + $0x88] sm:$0xff]
    %v227 = vld [vmem:[#allocation7 + $0x90] sm:$0xff]
    %v228 = vld [vmem:[#allocation7 + $0x98] sm:$0xff]
    %v229 = vld [vmem:[#allocation7 + $0xa0] sm:$0xff]
    %v230 = vld [vmem:[#allocation7 + $0xa8] sm:$0xff]
    %v231 = vld [vmem:[#allocation7 + $0xb0] sm:$0xff]
    %v232 = vld [vmem:[#allocation7 + $0xb8] sm:$0xff]
    %v233 = vld [vmem:[#allocation7 + $0xc0] sm:$0xff]
    %v234 = vld [vmem:[#allocation7 + $0xc8] sm:$0xff]
    %v235 = vld [vmem:[#allocation7 + $0xd0] sm:$0xff]
    %v236 = vld [vmem:[#allocation7 + $0xd8] sm:$0xff]
    %v237 = vld [vmem:[#allocation7 + $0xe0] sm:$0xff]
    %v238 = vld [vmem:[#allocation7 + $0xe8] sm:$0xff]
    %v239 = vld [vmem:[#allocation7 + $0xf0] sm:$0xff]
    %v240 = vld [vmem:[#allocation7 + $0xf8] sm:$0xff]
    %v241 = vld [vmem:[#allocation7 + $0x100] sm:$0xff]
    %v242 = vld [vmem:[#allocation7 + $0x108] sm:$0xff]
    %v243 = vld [vmem:[#allocation7 + $0x110] sm:$0xff]
    %v244 = vld [vmem:[#allocation7 + $0x118] sm:$0xff]
    %v245 = vld [vmem:[#allocation7 + $0x120] sm:$0xff]
    %v246 = vld [vmem:[#allocation7 + $0x128] sm:$0xff]
    %v247 = vld [vmem:[#allocation7 + $0x130] sm:$0xff]
    %v248 = vld [vmem:[#allocation7 + $0x138] sm:$0xff]
    %v249 = vld [vmem:[#allocation7 + $0x140] sm:$0xff]
    %v250 = vld [vmem:[#allocation7 + $0x148] sm:$0xff]
    %v251 = vld [vmem:[#allocation7 + $0x150] sm:$0xff]
    %v252 = vld [vmem:[#allocation7 + $0x158] sm:$0xff]
    %v253 = vld [vmem:[#allocation7 + $0x160] sm:$0xff]
    %v254 = vld [vmem:[#allocation7 + $0x168] sm:$0xff]
    %v255 = vld [vmem:[#allocation7 + $0x170] sm:$0xff]
    %v256 = vld [vmem:[#allocation7 + $0x178] sm:$0xff]
    %v257 = vld [vmem:[#allocation7 + $0x180] sm:$0xff]
    %v258 = vld [vmem:[#allocation7 + $0x188] sm:$0xff]
    %v259 = vld [vmem:[#allocation7 + $0x190] sm:$0xff]
    %v260 = vld [vmem:[#allocation7 + $0x198] sm:$0xff]
    %v261 = vld [vmem:[#allocation7 + $0x1a0] sm:$0xff]
    %v262 = vld [vmem:[#allocation7 + $0x1a8] sm:$0xff]
    %v263 = vld [vmem:[#allocation7 + $0x1b0] sm:$0xff]
    %v264 = vld [vmem:[#allocation7 + $0x1b8] sm:$0xff]
    %v265 = vld [vmem:[#allocation7 + $0x1c0] sm:$0xff]
    %v266 = vld [vmem:[#allocation7 + $0x1c8] sm:$0xff]
    %v267 = vld [vmem:[#allocation7 + $0x1d0] sm:$0xff]
    %v268 = vld [vmem:[#allocation7 + $0x1d8] sm:$0xff]
    %v269 = vld [vmem:[#allocation7 + $0x1e0] sm:$0xff]
    %v270 = vld [vmem:[#allocation7 + $0x1e8] sm:$0xff]
    %v271 = vld [vmem:[#allocation7 + $0x1f0] sm:$0xff]
    %v272 = vld [vmem:[#allocation7 + $0x1f8] sm:$0xff]
    %v273 = vld [vmem:[#allocation8] sm:$0xf]
    %v275 = vperm.slane %v273, 0
    %v276 = vperm.slane %v273, 1
    %v277 = vperm.slane %v273, 2
    %v278 = vperm.slane %v273, 3
    %v347 = vunpack.c.l.b16 %v209
    %v348 = vunpack.c.h.b16 %v209
    %v349 = vunpack.c.l.b16 %v210
    %v350 = vunpack.c.h.b16 %v210
    %v351 = vunpack.c.l.b16 %v211
    %v352 = vunpack.c.h.b16 %v211
    %v353 = vunpack.c.l.b16 %v212
    %v354 = vunpack.c.h.b16 %v212
    %v355 = vunpack.c.l.b16 %v213
    %v356 = vunpack.c.h.b16 %v213
    %v357 = vunpack.c.l.b16 %v214
    %v358 = vunpack.c.h.b16 %v214
    %v359 = vunpack.c.l.b16 %v215
    %v360 = vunpack.c.h.b16 %v215
    %v361 = vunpack.c.l.b16 %v216
    %v362 = vunpack.c.h.b16 %v216
    %v363 = vunpack.c.l.b16 %v217
    %v364 = vunpack.c.h.b16 %v217
    %v365 = vunpack.c.l.b16 %v218
    %v366 = vunpack.c.h.b16 %v218
    %v367 = vunpack.c.l.b16 %v219
    %v368 = vunpack.c.h.b16 %v219
    %v369 = vunpack.c.l.b16 %v220
    %v370 = vunpack.c.h.b16 %v220
    %v371 = vunpack.c.l.b16 %v221
    %v372 = vunpack.c.h.b16 %v221
    %v373 = vunpack.c.l.b16 %v222
    %v374 = vunpack.c.h.b16 %v222
    %v375 = vunpack.c.l.b16 %v223
    %v376 = vunpack.c.h.b16 %v223
    %v377 = vunpack.c.l.b16 %v224
    %v378 = vunpack.c.h.b16 %v224
    %v379 = vunpack.c.l.b16 %v225
    %v380 = vunpack.c.h.b16 %v225
    %v381 = vunpack.c.l.b16 %v226
    %v382 = vunpack.c.h.b16 %v226
    %v383 = vunpack.c.l.b16 %v227
    %v384 = vunpack.c.h.b16 %v227
    %v385 = vunpack.c.l.b16 %v228
    %v386 = vunpack.c.h.b16 %v228
    %v387 = vunpack.c.l.b16 %v229
    %v388 = vunpack.c.h.b16 %v229
    %v389 = vunpack.c.l.b16 %v230
    %v390 = vunpack.c.h.b16 %v230
    %v391 = vunpack.c.l.b16 %v231
    %v392 = vunpack.c.h.b16 %v231
    %v393 = vunpack.c.l.b16 %v232
    %v394 = vunpack.c.h.b16 %v232
    %v395 = vunpack.c.l.b16 %v233
    %v396 = vunpack.c.h.b16 %v233
    %v397 = vunpack.c.l.b16 %v234
    %v398 = vunpack.c.h.b16 %v234
    %v399 = vunpack.c.l.b16 %v235
    %v400 = vunpack.c.h.b16 %v235
    %v401 = vunpack.c.l.b16 %v236
    %v402 = vunpack.c.h.b16 %v236
    %v403 = vunpack.c.l.b16 %v237
    %v404 = vunpack.c.h.b16 %v237
    %v405 = vunpack.c.l.b16 %v238
    %v406 = vunpack.c.h.b16 %v238
    %v407 = vunpack.c.l.b16 %v239
    %v408 = vunpack.c.h.b16 %v239
    %v409 = vunpack.c.l.b16 %v240
    %v410 = vunpack.c.h.b16 %v240
    %v411 = vunpack.c.l.b16 %v241
    %v412 = vunpack.c.h.b16 %v241
    %v413 = vunpack.c.l.b16 %v242
    %v414 = vunpack.c.h.b16 %v242
    %v415 = vunpack.c.l.b16 %v243
    %v416 = vunpack.c.h.b16 %v243
    %v417 = vunpack.c.l.b16 %v244
    %v418 = vunpack.c.h.b16 %v244
    %v419 = vunpack.c.l.b16 %v245
    %v420 = vunpack.c.h.b16 %v245
    %v421 = vunpack.c.l.b16 %v246
    %v422 = vunpack.c.h.b16 %v246
    %v423 = vunpack.c.l.b16 %v247
    %v424 = vunpack.c.h.b16 %v247
    %v425 = vunpack.c.l.b16 %v248
    %v426 = vunpack.c.h.b16 %v248
    %v427 = vunpack.c.l.b16 %v249
    %v428 = vunpack.c.h.b16 %v249
    %v429 = vunpack.c.l.b16 %v250
    %v430 = vunpack.c.h.b16 %v250
    %v431 = vunpack.c.l.b16 %v251
    %v432 = vunpack.c.h.b16 %v251
    %v433 = vunpack.c.l.b16 %v252
    %v434 = vunpack.c.h.b16 %v252
    %v435 = vunpack.c.l.b16 %v253
    %v436 = vunpack.c.h.b16 %v253
    %v437 = vunpack.c.l.b16 %v254
    %v438 = vunpack.c.h.b16 %v254
    %v439 = vunpack.c.l.b16 %v255
    %v440 = vunpack.c.h.b16 %v255
    %v441 = vunpack.c.l.b16 %v256
    %v442 = vunpack.c.h.b16 %v256
    %v443 = vunpack.c.l.b16 %v257
    %v444 = vunpack.c.h.b16 %v257
    %v445 = vunpack.c.l.b16 %v258
    %v446 = vunpack.c.h.b16 %v258
    %v447 = vunpack.c.l.b16 %v259
    %v448 = vunpack.c.h.b16 %v259
    %v449 = vunpack.c.l.b16 %v260
    %v450 = vunpack.c.h.b16 %v260
    %v451 = vunpack.c.l.b16 %v261
    %v452 = vunpack.c.h.b16 %v261
    %v453 = vunpack.c.l.b16 %v262
    %v454 = vunpack.c.h.b16 %v262
    %v455 = vunpack.c.l.b16 %v263
    %v456 = vunpack.c.h.b16 %v263
    %v457 = vunpack.c.l.b16 %v264
    %v458 = vunpack.c.h.b16 %v264
    %v459 = vunpack.c.l.b16 %v265
    %v460 = vunpack.c.h.b16 %v265
    %v461 = vunpack.c.l.b16 %v266
    %v462 = vunpack.c.h.b16 %v266
    %v463 = vunpack.c.l.b16 %v267
    %v464 = vunpack.c.h.b16 %v267
    %v465 = vunpack.c.l.b16 %v268
    %v466 = vunpack.c.h.b16 %v268
    %v467 = vunpack.c.l.b16 %v269
    %v468 = vunpack.c.h.b16 %v269
    %v469 = vunpack.c.l.b16 %v270
    %v470 = vunpack.c.h.b16 %v270
    %v471 = vunpack.c.l.b16 %v271
    %v472 = vunpack.c.h.b16 %v271
    %v473 = vunpack.c.l.b16 %v272
    %v474 = vunpack.c.h.b16 %v272
    %v475 = vpack.c.b16 %v351, %v347
    %v476 = vpack.c.b16 %v352, %v348
    %v477 = vpack.c.b16 %v353, %v349
    %v478 = vpack.c.b16 %v354, %v350
    %v479 = vpack.c.b16 %v359, %v355
    %v480 = vpack.c.b16 %v360, %v356
    %v481 = vpack.c.b16 %v361, %v357
    %v482 = vpack.c.b16 %v362, %v358
    %v483 = vpack.c.b16 %v367, %v363
    %v484 = vpack.c.b16 %v368, %v364
    %v485 = vpack.c.b16 %v369, %v365
    %v486 = vpack.c.b16 %v370, %v366
    %v487 = vpack.c.b16 %v375, %v371
    %v488 = vpack.c.b16 %v376, %v372
    %v489 = vpack.c.b16 %v377, %v373
    %v490 = vpack.c.b16 %v378, %v374
    %v491 = vpack.c.b16 %v383, %v379
    %v492 = vpack.c.b16 %v384, %v380
    %v493 = vpack.c.b16 %v385, %v381
    %v494 = vpack.c.b16 %v386, %v382
    %v495 = vpack.c.b16 %v391, %v387
    %v496 = vpack.c.b16 %v392, %v388
    %v497 = vpack.c.b16 %v393, %v389
    %v498 = vpack.c.b16 %v394, %v390
    %v499 = vpack.c.b16 %v399, %v395
    %v500 = vpack.c.b16 %v400, %v396
    %v501 = vpack.c.b16 %v401, %v397
    %v502 = vpack.c.b16 %v402, %v398
    %v503 = vpack.c.b16 %v407, %v403
    %v504 = vpack.c.b16 %v408, %v404
    %v505 = vpack.c.b16 %v409, %v405
    %v506 = vpack.c.b16 %v410, %v406
    %v507 = vpack.c.b16 %v415, %v411
    %v508 = vpack.c.b16 %v416, %v412
    %v509 = vpack.c.b16 %v417, %v413
    %v510 = vpack.c.b16 %v418, %v414
    %v511 = vpack.c.b16 %v423, %v419
    %v512 = vpack.c.b16 %v424, %v420
    %v513 = vpack.c.b16 %v425, %v421
    %v514 = vpack.c.b16 %v426, %v422
    %v515 = vpack.c.b16 %v431, %v427
    %v516 = vpack.c.b16 %v432, %v428
    %v517 = vpack.c.b16 %v433, %v429
    %v518 = vpack.c.b16 %v434, %v430
    %v519 = vpack.c.b16 %v439, %v435
    %v520 = vpack.c.b16 %v440, %v436
    %v521 = vpack.c.b16 %v441, %v437
    %v522 = vpack.c.b16 %v442, %v438
    %v523 = vpack.c.b16 %v447, %v443
    %v524 = vpack.c.b16 %v448, %v444
    %v525 = vpack.c.b16 %v449, %v445
    %v526 = vpack.c.b16 %v450, %v446
    %v527 = vpack.c.b16 %v455, %v451
    %v528 = vpack.c.b16 %v456, %v452
    %v529 = vpack.c.b16 %v457, %v453
    %v530 = vpack.c.b16 %v458, %v454
    %v531 = vpack.c.b16 %v463, %v459
    %v532 = vpack.c.b16 %v464, %v460
    %v533 = vpack.c.b16 %v465, %v461
    %v534 = vpack.c.b16 %v466, %v462
    %v535 = vpack.c.b16 %v471, %v467
    %v536 = vpack.c.b16 %v472, %v468
    %v537 = vpack.c.b16 %v473, %v469
    %v538 = vpack.c.b16 %v474, %v470
    %603 = vmatpush.bf16.msra.mxu0 %v503
    %604 = vmatpush.bf16.msra.mxu0 %v499
    %605 = vmatpush.bf16.msra.mxu0 %v495
    %606 = vmatpush.bf16.msra.mxu0 %v491
    %607 = vmatpush.bf16.msra.mxu0 %v487
    %608 = vmatpush.bf16.msra.mxu0 %v483
    %609 = vmatpush.bf16.msra.mxu0 %v479
    %610 = vmatpush.bf16.msra.mxu0 %v475
    %611 = vmatmul.bf16.gmra.mxu0 %v207
    %v612 = vpop.f32.mrf.mxu0
    %v613 = vadd.f32 %v275, %v612
    %v614 = vpop.f32.mrf.mxu0
    %v615 = vadd.f32 %v275, %v614
    %616 = vdwg.mxu0
    %617 = vmatpush.bf16.msra.mxu0 %v535
    %618 = vmatpush.bf16.msra.mxu0 %v531
    %619 = vmatpush.bf16.msra.mxu0 %v527
    %620 = vmatpush.bf16.msra.mxu0 %v523
    %621 = vmatpush.bf16.msra.mxu0 %v519
    %622 = vmatpush.bf16.msra.mxu0 %v515
    %623 = vmatpush.bf16.msra.mxu0 %v511
    %624 = vmatpush.bf16.msra.mxu0 %v507
    %625 = vmatmul.bf16.gmra.mxu0 %v208
    %v626 = vpop.f32.mrf.mxu0
    %v627 = vadd.f32 %v613, %v626
    %v628 = vpop.f32.mrf.mxu0
    %v629 = vadd.f32 %v615, %v628
    %630 = vdwg.mxu0
    %631 = vmatpush.bf16.msra.mxu0 %v504
    %632 = vmatpush.bf16.msra.mxu0 %v500
    %633 = vmatpush.bf16.msra.mxu0 %v496
    %634 = vmatpush.bf16.msra.mxu0 %v492
    %635 = vmatpush.bf16.msra.mxu0 %v488
    %636 = vmatpush.bf16.msra.mxu0 %v484
    %637 = vmatpush.bf16.msra.mxu0 %v480
    %638 = vmatpush.bf16.msra.mxu0 %v476
    %639 = vmatmul.bf16.gmra.mxu0 %v207
    %v640 = vpop.f32.mrf.mxu0
    %v641 = vadd.f32 %v276, %v640
    %v642 = vpop.f32.mrf.mxu0
    %v643 = vadd.f32 %v276, %v642
    %644 = vdwg.mxu0
    %645 = vmatpush.bf16.msra.mxu0 %v536
    %646 = vmatpush.bf16.msra.mxu0 %v532
    %647 = vmatpush.bf16.msra.mxu0 %v528
    %648 = vmatpush.bf16.msra.mxu0 %v524
    %649 = vmatpush.bf16.msra.mxu0 %v520
    %650 = vmatpush.bf16.msra.mxu0 %v516
    %651 = vmatpush.bf16.msra.mxu0 %v512
    %652 = vmatpush.bf16.msra.mxu0 %v508
    %653 = vmatmul.bf16.gmra.mxu0 %v208
    %v654 = vpop.f32.mrf.mxu0
    %v655 = vadd.f32 %v641, %v654
    %v656 = vpop.f32.mrf.mxu0
    %v657 = vadd.f32 %v643, %v656
    %658 = vdwg.mxu0
    %659 = vmatpush.bf16.msra.mxu0 %v505
    %660 = vmatpush.bf16.msra.mxu0 %v501
    %661 = vmatpush.bf16.msra.mxu0 %v497
    %662 = vmatpush.bf16.msra.mxu0 %v493
    %663 = vmatpush.bf16.msra.mxu0 %v489
    %664 = vmatpush.bf16.msra.mxu0 %v485
    %665 = vmatpush.bf16.msra.mxu0 %v481
    %666 = vmatpush.bf16.msra.mxu0 %v477
    %667 = vmatmul.bf16.gmra.mxu0 %v207
    %v668 = vpop.f32.mrf.mxu0
    %v669 = vadd.f32 %v277, %v668
    %v670 = vpop.f32.mrf.mxu0
    %v671 = vadd.f32 %v277, %v670
    %672 = vdwg.mxu0
    %673 = vmatpush.bf16.msra.mxu0 %v537
    %674 = vmatpush.bf16.msra.mxu0 %v533
    %675 = vmatpush.bf16.msra.mxu0 %v529
    %676 = vmatpush.bf16.msra.mxu0 %v525
    %677 = vmatpush.bf16.msra.mxu0 %v521
    %678 = vmatpush.bf16.msra.mxu0 %v517
    %679 = vmatpush.bf16.msra.mxu0 %v513
    %680 = vmatpush.bf16.msra.mxu0 %v509
    %681 = vmatmul.bf16.gmra.mxu0 %v208
    %v682 = vpop.f32.mrf.mxu0
    %v683 = vadd.f32 %v669, %v682
    %v684 = vpop.f32.mrf.mxu0
    %v685 = vadd.f32 %v671, %v684
    %686 = vdwg.mxu0
    %687 = vmatpush.bf16.msra.mxu0 %v506
    %688 = vmatpush.bf16.msra.mxu0 %v502
    %689 = vmatpush.bf16.msra.mxu0 %v498
    %690 = vmatpush.bf16.msra.mxu0 %v494
    %691 = vmatpush.bf16.msra.mxu0 %v490
    %692 = vmatpush.bf16.msra.mxu0 %v486
    %693 = vmatpush.bf16.msra.mxu0 %v482
    %694 = vmatpush.bf16.msra.mxu0 %v478
    %695 = vmatmul.bf16.gmra.mxu0 %v207
    %v696 = vpop.f32.mrf.mxu0
    %v697 = vadd.f32 %v278, %v696
    %v698 = vpop.f32.mrf.mxu0
    %v699 = vadd.f32 %v278, %v698
    %700 = vdwg.mxu0
    %701 = vmatpush.bf16.msra.mxu0 %v538
    %702 = vmatpush.bf16.msra.mxu0 %v534
    %703 = vmatpush.bf16.msra.mxu0 %v530
    %704 = vmatpush.bf16.msra.mxu0 %v526
    %705 = vmatpush.bf16.msra.mxu0 %v522
    %706 = vmatpush.bf16.msra.mxu0 %v518
    %707 = vmatpush.bf16.msra.mxu0 %v514
    %708 = vmatpush.bf16.msra.mxu0 %v510
    %709 = vmatmul.bf16.gmra.mxu0 %v208
    %v710 = vpop.f32.mrf.mxu0
    %v711 = vadd.f32 %v697, %v710
    %v712 = vpop.f32.mrf.mxu0
    %v713 = vadd.f32 %v699, %v712
    %714 = vdwg.mxu0
    %v715 = vmax.f32 %v627, 0.0
    %v716 = vmax.f32 %v655, 0.0
    %v717 = vmax.f32 %v683, 0.0
    %v718 = vmax.f32 %v711, 0.0
    %v719 = vmax.f32 %v629, 0.0
    %v720 = vmax.f32 %v657, 0.0
    %v721 = vmax.f32 %v685, 0.0
    %v722 = vmax.f32 %v713, 0.0
    %v723 = vpack.c.bf16 %v719, %v715
    %v724 = vpack.c.bf16 %v720, %v716
    %v725 = vpack.c.bf16 %v721, %v717
    %v726 = vpack.c.bf16 %v722, %v718
    %v727 = vld [vmem:[#allocation10] sm:$0xff]
    %v728 = vld [vmem:[#allocation10 + $0x8] sm:$0xff]
    %v729 = vld [vmem:[#allocation10 + $0x10] sm:$0xff]
    %v730 = vld [vmem:[#allocation10 + $0x18] sm:$0xff]
    %v731 = vld [vmem:[#allocation10 + $0x20] sm:$0xff]
    %v732 = vld [vmem:[#allocation10 + $0x28] sm:$0xff]
    %v733 = vld [vmem:[#allocation10 + $0x30] sm:$0xff]
    %v734 = vld [vmem:[#allocation10 + $0x38] sm:$0xff]
    %v735 = vld [vmem:[#allocation10 + $0x40] sm:$0xff]
    %v736 = vld [vmem:[#allocation10 + $0x48] sm:$0xff]
    %v737 = vld [vmem:[#allocation10 + $0x50] sm:$0xff]
    %v738 = vld [vmem:[#allocation10 + $0x58] sm:$0xff]
    %v739 = vld [vmem:[#allocation10 + $0x60] sm:$0xff]
    %v740 = vld [vmem:[#allocation10 + $0x68] sm:$0xff]
    %v741 = vld [vmem:[#allocation10 + $0x70] sm:$0xff]
    %v742 = vld [vmem:[#allocation10 + $0x78] sm:$0xff]
    %v743 = vld [vmem:[#allocation10 + $0x80] sm:$0xff]
    %v744 = vld [vmem:[#allocation10 + $0x88] sm:$0xff]
    %v745 = vld [vmem:[#allocation10 + $0x90] sm:$0xff]
    %v746 = vld [vmem:[#allocation10 + $0x98] sm:$0xff]
    %v747 = vld [vmem:[#allocation10 + $0xa0] sm:$0xff]
    %v748 = vld [vmem:[#allocation10 + $0xa8] sm:$0xff]
    %v749 = vld [vmem:[#allocation10 + $0xb0] sm:$0xff]
    %v750 = vld [vmem:[#allocation10 + $0xb8] sm:$0xff]
    %v751 = vld [vmem:[#allocation10 + $0xc0] sm:$0xff]
    %v752 = vld [vmem:[#allocation10 + $0xc8] sm:$0xff]
    %v753 = vld [vmem:[#allocation10 + $0xd0] sm:$0xff]
    %v754 = vld [vmem:[#allocation10 + $0xd8] sm:$0xff]
    %v755 = vld [vmem:[#allocation10 + $0xe0] sm:$0xff]
    %v756 = vld [vmem:[#allocation10 + $0xe8] sm:$0xff]
    %v757 = vld [vmem:[#allocation10 + $0xf0] sm:$0xff]
    %v758 = vld [vmem:[#allocation10 + $0xf8] sm:$0xff]
    %v759 = vld [vmem:[#allocation10 + $0x100] sm:$0xff]
    %v760 = vld [vmem:[#allocation10 + $0x108] sm:$0xff]
    %v761 = vld [vmem:[#allocation10 + $0x110] sm:$0xff]
    %v762 = vld [vmem:[#allocation10 + $0x118] sm:$0xff]
    %v763 = vld [vmem:[#allocation10 + $0x120] sm:$0xff]
    %v764 = vld [vmem:[#allocation10 + $0x128] sm:$0xff]
    %v765 = vld [vmem:[#allocation10 + $0x130] sm:$0xff]
    %v766 = vld [vmem:[#allocation10 + $0x138] sm:$0xff]
    %v767 = vld [vmem:[#allocation10 + $0x140] sm:$0xff]
    %v768 = vld [vmem:[#allocation10 + $0x148] sm:$0xff]
    %v769 = vld [vmem:[#allocation10 + $0x150] sm:$0xff]
    %v770 = vld [vmem:[#allocation10 + $0x158] sm:$0xff]
    %v771 = vld [vmem:[#allocation10 + $0x160] sm:$0xff]
    %v772 = vld [vmem:[#allocation10 + $0x168] sm:$0xff]
    %v773 = vld [vmem:[#allocation10 + $0x170] sm:$0xff]
    %v774 = vld [vmem:[#allocation10 + $0x178] sm:$0xff]
    %v775 = vld [vmem:[#allocation10 + $0x180] sm:$0xff]
    %v776 = vld [vmem:[#allocation10 + $0x188] sm:$0xff]
    %v777 = vld [vmem:[#allocation10 + $0x190] sm:$0xff]
    %v778 = vld [vmem:[#allocation10 + $0x198] sm:$0xff]
    %v779 = vld [vmem:[#allocation10 + $0x1a0] sm:$0xff]
    %v780 = vld [vmem:[#allocation10 + $0x1a8] sm:$0xff]
    %v781 = vld [vmem:[#allocation10 + $0x1b0] sm:$0xff]
    %v782 = vld [vmem:[#allocation10 + $0x1b8] sm:$0xff]
    %v783 = vld [vmem:[#allocation10 + $0x1c0] sm:$0xff]
    %v784 = vld [vmem:[#allocation10 + $0x1c8] sm:$0xff]
    %v785 = vld [vmem:[#allocation10 + $0x1d0] sm:$0xff]
    %v786 = vld [vmem:[#allocation10 + $0x1d8] sm:$0xff]
    %v787 = vld [vmem:[#allocation10 + $0x1e0] sm:$0xff]
    %v788 = vld [vmem:[#allocation10 + $0x1e8] sm:$0xff]
    %v789 = vld [vmem:[#allocation10 + $0x1f0] sm:$0xff]
    %v790 = vld [vmem:[#allocation10 + $0x1f8] sm:$0xff]
    %v791 = vld [vmem:[%s5] sm:$0x3]
    %v793 = vperm.slane %v791, 0
    %v794 = vperm.slane %v791, 1
    %v861 = vunpack.c.l.b16 %v727
    %v862 = vunpack.c.h.b16 %v727
    %v863 = vunpack.c.l.b16 %v728
    %v864 = vunpack.c.h.b16 %v728
    %v865 = vunpack.c.l.b16 %v729
    %v866 = vunpack.c.h.b16 %v729
    %v867 = vunpack.c.l.b16 %v730
    %v868 = vunpack.c.h.b16 %v730
    %v869 = vunpack.c.l.b16 %v731
    %v870 = vunpack.c.h.b16 %v731
    %v871 = vunpack.c.l.b16 %v732
    %v872 = vunpack.c.h.b16 %v732
    %v873 = vunpack.c.l.b16 %v733
    %v874 = vunpack.c.h.b16 %v733
    %v875 = vunpack.c.l.b16 %v734
    %v876 = vunpack.c.h.b16 %v734
    %v877 = vunpack.c.l.b16 %v735
    %v878 = vunpack.c.h.b16 %v735
    %v879 = vunpack.c.l.b16 %v736
    %v880 = vunpack.c.h.b16 %v736
    %v881 = vunpack.c.l.b16 %v737
    %v882 = vunpack.c.h.b16 %v737
    %v883 = vunpack.c.l.b16 %v738
    %v884 = vunpack.c.h.b16 %v738
    %v885 = vunpack.c.l.b16 %v739
    %v886 = vunpack.c.h.b16 %v739
    %v887 = vunpack.c.l.b16 %v740
    %v888 = vunpack.c.h.b16 %v740
    %v889 = vunpack.c.l.b16 %v741
    %v890 = vunpack.c.h.b16 %v741
    %v891 = vunpack.c.l.b16 %v742
    %v892 = vunpack.c.h.b16 %v742
    %v893 = vunpack.c.l.b16 %v743
    %v894 = vunpack.c.h.b16 %v743
    %v895 = vunpack.c.l.b16 %v744
    %v896 = vunpack.c.h.b16 %v744
    %v897 = vunpack.c.l.b16 %v745
    %v898 = vunpack.c.h.b16 %v745
    %v899 = vunpack.c.l.b16 %v746
    %v900 = vunpack.c.h.b16 %v746
    %v901 = vunpack.c.l.b16 %v747
    %v902 = vunpack.c.h.b16 %v747
    %v903 = vunpack.c.l.b16 %v748
    %v904 = vunpack.c.h.b16 %v748
    %v905 = vunpack.c.l.b16 %v749
    %v906 = vunpack.c.h.b16 %v749
    %v907 = vunpack.c.l.b16 %v750
    %v908 = vunpack.c.h.b16 %v750
    %v909 = vunpack.c.l.b16 %v751
    %v910 = vunpack.c.h.b16 %v751
    %v911 = vunpack.c.l.b16 %v752
    %v912 = vunpack.c.h.b16 %v752
    %v913 = vunpack.c.l.b16 %v753
    %v914 = vunpack.c.h.b16 %v753
    %v915 = vunpack.c.l.b16 %v754
    %v916 = vunpack.c.h.b16 %v754
    %v917 = vunpack.c.l.b16 %v755
    %v918 = vunpack.c.h.b16 %v755
    %v919 = vunpack.c.l.b16 %v756
    %v920 = vunpack.c.h.b16 %v756
    %v921 = vunpack.c.l.b16 %v757
    %v922 = vunpack.c.h.b16 %v757
    %v923 = vunpack.c.l.b16 %v758
    %v924 = vunpack.c.h.b16 %v758
    %v925 = vunpack.c.l.b16 %v759
    %v926 = vunpack.c.h.b16 %v759
    %v927 = vunpack.c.l.b16 %v760
    %v928 = vunpack.c.h.b16 %v760
    %v929 = vunpack.c.l.b16 %v761
    %v930 = vunpack.c.h.b16 %v761
    %v931 = vunpack.c.l.b16 %v762
    %v932 = vunpack.c.h.b16 %v762
    %v933 = vunpack.c.l.b16 %v763
    %v934 = vunpack.c.h.b16 %v763
    %v935 = vunpack.c.l.b16 %v764
    %v936 = vunpack.c.h.b16 %v764
    %v937 = vunpack.c.l.b16 %v765
    %v938 = vunpack.c.h.b16 %v765
    %v939 = vunpack.c.l.b16 %v766
    %v940 = vunpack.c.h.b16 %v766
    %v941 = vunpack.c.l.b16 %v767
    %v942 = vunpack.c.h.b16 %v767
    %v943 = vunpack.c.l.b16 %v768
    %v944 = vunpack.c.h.b16 %v768
    %v945 = vunpack.c.l.b16 %v769
    %v946 = vunpack.c.h.b16 %v769
    %v947 = vunpack.c.l.b16 %v770
    %v948 = vunpack.c.h.b16 %v770
    %v949 = vunpack.c.l.b16 %v771
    %v950 = vunpack.c.h.b16 %v771
    %v951 = vunpack.c.l.b16 %v772
    %v952 = vunpack.c.h.b16 %v772
    %v953 = vunpack.c.l.b16 %v773
    %v954 = vunpack.c.h.b16 %v773
    %v955 = vunpack.c.l.b16 %v774
    %v956 = vunpack.c.h.b16 %v774
    %v957 = vunpack.c.l.b16 %v775
    %v958 = vunpack.c.h.b16 %v775
    %v959 = vunpack.c.l.b16 %v776
    %v960 = vunpack.c.h.b16 %v776
    %v961 = vunpack.c.l.b16 %v777
    %v962 = vunpack.c.h.b16 %v777
    %v963 = vunpack.c.l.b16 %v778
    %v964 = vunpack.c.h.b16 %v778
    %v965 = vunpack.c.l.b16 %v779
    %v966 = vunpack.c.h.b16 %v779
    %v967 = vunpack.c.l.b16 %v780
    %v968 = vunpack.c.h.b16 %v780
    %v969 = vunpack.c.l.b16 %v781
    %v970 = vunpack.c.h.b16 %v781
    %v971 = vunpack.c.l.b16 %v782
    %v972 = vunpack.c.h.b16 %v782
    %v973 = vunpack.c.l.b16 %v783
    %v974 = vunpack.c.h.b16 %v783
    %v975 = vunpack.c.l.b16 %v784
    %v976 = vunpack.c.h.b16 %v784
    %v977 = vunpack.c.l.b16 %v785
    %v978 = vunpack.c.h.b16 %v785
    %v979 = vunpack.c.l.b16 %v786
    %v980 = vunpack.c.h.b16 %v786
    %v981 = vunpack.c.l.b16 %v787
    %v982 = vunpack.c.h.b16 %v787
    %v983 = vunpack.c.l.b16 %v788
    %v984 = vunpack.c.h.b16 %v788
    %v985 = vunpack.c.l.b16 %v789
    %v986 = vunpack.c.h.b16 %v789
    %v987 = vunpack.c.l.b16 %v790
    %v988 = vunpack.c.h.b16 %v790
    %v989 = vpack.c.b16 %v863, %v861
    %v990 = vpack.c.b16 %v864, %v862
    %v991 = vpack.c.b16 %v867, %v865
    %v992 = vpack.c.b16 %v868, %v866
    %v993 = vpack.c.b16 %v871, %v869
    %v994 = vpack.c.b16 %v872, %v870
    %v995 = vpack.c.b16 %v875, %v873
    %v996 = vpack.c.b16 %v876, %v874
    %v997 = vpack.c.b16 %v879, %v877
    %v998 = vpack.c.b16 %v880, %v878
    %v999 = vpack.c.b16 %v883, %v881
    %v1000 = vpack.c.b16 %v884, %v882
    %v1001 = vpack.c.b16 %v887, %v885
    %v1002 = vpack.c.b16 %v888, %v886
    %v1003 = vpack.c.b16 %v891, %v889
    %v1004 = vpack.c.b16 %v892, %v890
    %v1005 = vpack.c.b16 %v895, %v893
    %v1006 = vpack.c.b16 %v896, %v894
    %v1007 = vpack.c.b16 %v899, %v897
    %v1008 = vpack.c.b16 %v900, %v898
    %v1009 = vpack.c.b16 %v903, %v901
    %v1010 = vpack.c.b16 %v904, %v902
    %v1011 = vpack.c.b16 %v907, %v905
    %v1012 = vpack.c.b16 %v908, %v906
    %v1013 = vpack.c.b16 %v911, %v909
    %v1014 = vpack.c.b16 %v912, %v910
    %v1015 = vpack.c.b16 %v915, %v913
    %v1016 = vpack.c.b16 %v916, %v914
    %v1017 = vpack.c.b16 %v919, %v917
    %v1018 = vpack.c.b16 %v920, %v918
    %v1019 = vpack.c.b16 %v923, %v921
    %v1020 = vpack.c.b16 %v924, %v922
    %v1021 = vpack.c.b16 %v927, %v925
    %v1022 = vpack.c.b16 %v928, %v926
    %v1023 = vpack.c.b16 %v931, %v929
    %v1024 = vpack.c.b16 %v932, %v930
    %v1025 = vpack.c.b16 %v935, %v933
    %v1026 = vpack.c.b16 %v936, %v934
    %v1027 = vpack.c.b16 %v939, %v937
    %v1028 = vpack.c.b16 %v940, %v938
    %v1029 = vpack.c.b16 %v943, %v941
    %v1030 = vpack.c.b16 %v944, %v942
    %v1031 = vpack.c.b16 %v947, %v945
    %v1032 = vpack.c.b16 %v948, %v946
    %v1033 = vpack.c.b16 %v951, %v949
    %v1034 = vpack.c.b16 %v952, %v950
    %v1035 = vpack.c.b16 %v955, %v953
    %v1036 = vpack.c.b16 %v956, %v954
    %v1037 = vpack.c.b16 %v959, %v957
    %v1038 = vpack.c.b16 %v960, %v958
    %v1039 = vpack.c.b16 %v963, %v961
    %v1040 = vpack.c.b16 %v964, %v962
    %v1041 = vpack.c.b16 %v967, %v965
    %v1042 = vpack.c.b16 %v968, %v966
    %v1043 = vpack.c.b16 %v971, %v969
    %v1044 = vpack.c.b16 %v972, %v970
    %v1045 = vpack.c.b16 %v975, %v973
    %v1046 = vpack.c.b16 %v976, %v974
    %v1047 = vpack.c.b16 %v979, %v977
    %v1048 = vpack.c.b16 %v980, %v978
    %v1049 = vpack.c.b16 %v983, %v981
    %v1050 = vpack.c.b16 %v984, %v982
    %v1051 = vpack.c.b16 %v987, %v985
    %v1052 = vpack.c.b16 %v988, %v986
    %1117 = vmatpush.bf16.msra.mxu0 %v1003
    %1118 = vmatpush.bf16.msra.mxu0 %v1001
    %1119 = vmatpush.bf16.msra.mxu0 %v999
    %1120 = vmatpush.bf16.msra.mxu0 %v997
    %1121 = vmatpush.bf16.msra.mxu0 %v995
    %1122 = vmatpush.bf16.msra.mxu0 %v993
    %1123 = vmatpush.bf16.msra.mxu0 %v991
    %1124 = vmatpush.bf16.msra.mxu0 %v989
    %1125 = vmatmul.bf16.gmra.mxu0 %v723
    %v1126 = vpop.f32.mrf.mxu0
    %v1127 = vadd.f32 %v793, %v1126
    %v1128 = vpop.f32.mrf.mxu0
    %v1129 = vadd.f32 %v793, %v1128
    %1130 = vdwg.mxu0
    %1131 = vmatpush.bf16.msra.mxu0 %v1019
    %1132 = vmatpush.bf16.msra.mxu0 %v1017
    %1133 = vmatpush.bf16.msra.mxu0 %v1015
    %1134 = vmatpush.bf16.msra.mxu0 %v1013
    %1135 = vmatpush.bf16.msra.mxu0 %v1011
    %1136 = vmatpush.bf16.msra.mxu0 %v1009
    %1137 = vmatpush.bf16.msra.mxu0 %v1007
    %1138 = vmatpush.bf16.msra.mxu0 %v1005
    %1139 = vmatmul.bf16.gmra.mxu0 %v724
    %v1140 = vpop.f32.mrf.mxu0
    %v1141 = vadd.f32 %v1127, %v1140
    %v1142 = vpop.f32.mrf.mxu0
    %v1143 = vadd.f32 %v1129, %v1142
    %1144 = vdwg.mxu0
    %1145 = vmatpush.bf16.msra.mxu0 %v1035
    %1146 = vmatpush.bf16.msra.mxu0 %v1033
    %1147 = vmatpush.bf16.msra.mxu0 %v1031
    %1148 = vmatpush.bf16.msra.mxu0 %v1029
    %1149 = vmatpush.bf16.msra.mxu0 %v1027
    %1150 = vmatpush.bf16.msra.mxu0 %v1025
    %1151 = vmatpush.bf16.msra.mxu0 %v1023
    %1152 = vmatpush.bf16.msra.mxu0 %v1021
    %1153 = vmatmul.bf16.gmra.mxu0 %v725
    %v1154 = vpop.f32.mrf.mxu0
    %v1155 = vadd.f32 %v1141, %v1154
    %v1156 = vpop.f32.mrf.mxu0
    %v1157 = vadd.f32 %v1143, %v1156
    %1158 = vdwg.mxu0
    %1159 = vmatpush.bf16.msra.mxu0 %v1051
    %1160 = vmatpush.bf16.msra.mxu0 %v1049
    %1161 = vmatpush.bf16.msra.mxu0 %v1047
    %1162 = vmatpush.bf16.msra.mxu0 %v1045
    %1163 = vmatpush.bf16.msra.mxu0 %v1043
    %1164 = vmatpush.bf16.msra.mxu0 %v1041
    %1165 = vmatpush.bf16.msra.mxu0 %v1039
    %1166 = vmatpush.bf16.msra.mxu0 %v1037
    %1167 = vmatmul.bf16.gmra.mxu0 %v726
    %v1168 = vpop.f32.mrf.mxu0
    %v1169 = vadd.f32 %v1155, %v1168
    %v1170 = vpop.f32.mrf.mxu0
    %v1171 = vadd.f32 %v1157, %v1170
    %1172 = vdwg.mxu0
    %1173 = vmatpush.bf16.msra.mxu0 %v1004
    %1174 = vmatpush.bf16.msra.mxu0 %v1002
    %1175 = vmatpush.bf16.msra.mxu0 %v1000
    %1176 = vmatpush.bf16.msra.mxu0 %v998
    %1177 = vmatpush.bf16.msra.mxu0 %v996
    %1178 = vmatpush.bf16.msra.mxu0 %v994
    %1179 = vmatpush.bf16.msra.mxu0 %v992
    %1180 = vmatpush.bf16.msra.mxu0 %v990
    %1181 = vmatmul.bf16.gmra.mxu0 %v723
    %v1182 = vpop.f32.mrf.mxu0
    %v1183 = vadd.f32 %v794, %v1182
    %v1184 = vpop.f32.mrf.mxu0
    %v1185 = vadd.f32 %v794, %v1184
    %1186 = vdwg.mxu0
    %1187 = vmatpush.bf16.msra.mxu0 %v1020
    %1188 = vmatpush.bf16.msra.mxu0 %v1018
    %1189 = vmatpush.bf16.msra.mxu0 %v1016
    %1190 = vmatpush.bf16.msra.mxu0 %v1014
    %1191 = vmatpush.bf16.msra.mxu0 %v1012
    %1192 = vmatpush.bf16.msra.mxu0 %v1010
    %1193 = vmatpush.bf16.msra.mxu0 %v1008
    %1194 = vmatpush.bf16.msra.mxu0 %v1006
    %1195 = vmatmul.bf16.gmra.mxu0 %v724
    %v1196 = vpop.f32.mrf.mxu0
    %v1197 = vadd.f32 %v1183, %v1196
    %v1198 = vpop.f32.mrf.mxu0
    %v1199 = vadd.f32 %v1185, %v1198
    %1200 = vdwg.mxu0
    %1201 = vmatpush.bf16.msra.mxu0 %v1036
    %1202 = vmatpush.bf16.msra.mxu0 %v1034
    %1203 = vmatpush.bf16.msra.mxu0 %v1032
    %1204 = vmatpush.bf16.msra.mxu0 %v1030
    %1205 = vmatpush.bf16.msra.mxu0 %v1028
    %1206 = vmatpush.bf16.msra.mxu0 %v1026
    %1207 = vmatpush.bf16.msra.mxu0 %v1024
    %1208 = vmatpush.bf16.msra.mxu0 %v1022
    %1209 = vmatmul.bf16.gmra.mxu0 %v725
    %v1210 = vpop.f32.mrf.mxu0
    %v1211 = vadd.f32 %v1197, %v1210
    %v1212 = vpop.f32.mrf.mxu0
    %v1213 = vadd.f32 %v1199, %v1212
    %1214 = vdwg.mxu0
    %1215 = vmatpush.bf16.msra.mxu0 %v1052
    %1216 = vmatpush.bf16.msra.mxu0 %v1050
    %1217 = vmatpush.bf16.msra.mxu0 %v1048
    %1218 = vmatpush.bf16.msra.mxu0 %v1046
    %1219 = vmatpush.bf16.msra.mxu0 %v1044
    %1220 = vmatpush.bf16.msra.mxu0 %v1042
    %1221 = vmatpush.bf16.msra.mxu0 %v1040
    %1222 = vmatpush.bf16.msra.mxu0 %v1038
    %1223 = vmatmul.bf16.gmra.mxu0 %v726
    %v1224 = vpop.f32.mrf.mxu0
    %v1225 = vadd.f32 %v1211, %v1224
    %v1226 = vpop.f32.mrf.mxu0
    %v1227 = vadd.f32 %v1213, %v1226
    %1228 = vdwg.mxu0
    %v1229 = vmax.f32 %v1169, 0.0
    %v1230 = vmax.f32 %v1225, 0.0
    %v1231 = vmax.f32 %v1171, 0.0
    %v1232 = vmax.f32 %v1227, 0.0
    %v1233 = vpack.c.bf16 %v1231, %v1229
    %v1234 = vpack.c.bf16 %v1232, %v1230
    %v1235 = vld [vmem:[#allocation11] sm:$0xf]
    %v1236 = vld [vmem:[#allocation11 + $0x4] sm:$0xf]
    %v1237 = vld [vmem:[#allocation11 + $0x8] sm:$0xf]
    %v1238 = vld [vmem:[#allocation11 + $0xc] sm:$0xf]
    %v1239 = vld [vmem:[#allocation11 + $0x10] sm:$0xf]
    %v1240 = vld [vmem:[#allocation11 + $0x14] sm:$0xf]
    %v1241 = vld [vmem:[#allocation11 + $0x18] sm:$0xf]
    %v1242 = vld [vmem:[#allocation11 + $0x1c] sm:$0xf]
    %v1243 = vld [vmem:[#allocation11 + $0x20] sm:$0xf]
    %v1244 = vld [vmem:[#allocation11 + $0x24] sm:$0xf]
    %v1245 = vld [vmem:[#allocation11 + $0x28] sm:$0xf]
    %v1246 = vld [vmem:[#allocation11 + $0x2c] sm:$0xf]
    %v1247 = vld [vmem:[#allocation11 + $0x30] sm:$0xf]
    %v1248 = vld [vmem:[#allocation11 + $0x34] sm:$0xf]
    %v1249 = vld [vmem:[#allocation11 + $0x38] sm:$0xf]
    %v1250 = vld [vmem:[#allocation11 + $0x3c] sm:$0xf]
    %v1251 = vld [vmem:[#allocation11 + $0x40] sm:$0xf]
    %v1252 = vld [vmem:[#allocation11 + $0x44] sm:$0xf]
    %v1253 = vld [vmem:[#allocation11 + $0x48] sm:$0xf]
    %v1254 = vld [vmem:[#allocation11 + $0x4c] sm:$0xf]
    %v1255 = vld [vmem:[#allocation11 + $0x50] sm:$0xf]
    %v1256 = vld [vmem:[#allocation11 + $0x54] sm:$0xf]
    %v1257 = vld [vmem:[#allocation11 + $0x58] sm:$0xf]
    %v1258 = vld [vmem:[#allocation11 + $0x5c] sm:$0xf]
    %v1259 = vld [vmem:[#allocation11 + $0x60] sm:$0xf]
    %v1260 = vld [vmem:[#allocation11 + $0x64] sm:$0xf]
    %v1261 = vld [vmem:[#allocation11 + $0x68] sm:$0xf]
    %v1262 = vld [vmem:[#allocation11 + $0x6c] sm:$0xf]
    %v1263 = vld [vmem:[#allocation11 + $0x70] sm:$0xf]
    %v1264 = vld [vmem:[#allocation11 + $0x74] sm:$0xf]
    %v1265 = vld [vmem:[#allocation11 + $0x78] sm:$0xf]
    %v1266 = vld [vmem:[#allocation11 + $0x7c] sm:$0xf]
    %v1267 = vld [vmem:[#allocation13] sm:$0x1]
    %v1269 = vperm.slane %v1267, 0
    %v1303 = vunpack.c.l.b16 %v1235
    %v1304 = vunpack.c.l.b16 %v1236
    %v1305 = vunpack.c.l.b16 %v1237
    %v1306 = vunpack.c.l.b16 %v1238
    %v1307 = vunpack.c.l.b16 %v1239
    %v1308 = vunpack.c.l.b16 %v1240
    %v1309 = vunpack.c.l.b16 %v1241
    %v1310 = vunpack.c.l.b16 %v1242
    %v1311 = vunpack.c.l.b16 %v1243
    %v1312 = vunpack.c.l.b16 %v1244
    %v1313 = vunpack.c.l.b16 %v1245
    %v1314 = vunpack.c.l.b16 %v1246
    %v1315 = vunpack.c.l.b16 %v1247
    %v1316 = vunpack.c.l.b16 %v1248
    %v1317 = vunpack.c.l.b16 %v1249
    %v1318 = vunpack.c.l.b16 %v1250
    %v1319 = vunpack.c.l.b16 %v1251
    %v1320 = vunpack.c.l.b16 %v1252
    %v1321 = vunpack.c.l.b16 %v1253
    %v1322 = vunpack.c.l.b16 %v1254
    %v1323 = vunpack.c.l.b16 %v1255
    %v1324 = vunpack.c.l.b16 %v1256
    %v1325 = vunpack.c.l.b16 %v1257
    %v1326 = vunpack.c.l.b16 %v1258
    %v1327 = vunpack.c.l.b16 %v1259
    %v1328 = vunpack.c.l.b16 %v1260
    %v1329 = vunpack.c.l.b16 %v1261
    %v1330 = vunpack.c.l.b16 %v1262
    %v1331 = vunpack.c.l.b16 %v1263
    %v1332 = vunpack.c.l.b16 %v1264
    %v1333 = vunpack.c.l.b16 %v1265
    %v1334 = vunpack.c.l.b16 %v1266
    %v1335 = vpack.c.b16 %v1304, %v1303
    %v1336 = vpack.c.b16 %v1306, %v1305
    %v1337 = vpack.c.b16 %v1308, %v1307
    %v1338 = vpack.c.b16 %v1310, %v1309
    %v1339 = vpack.c.b16 %v1312, %v1311
    %v1340 = vpack.c.b16 %v1314, %v1313
    %v1341 = vpack.c.b16 %v1316, %v1315
    %v1342 = vpack.c.b16 %v1318, %v1317
    %v1343 = vpack.c.b16 %v1320, %v1319
    %v1344 = vpack.c.b16 %v1322, %v1321
    %v1345 = vpack.c.b16 %v1324, %v1323
    %v1346 = vpack.c.b16 %v1326, %v1325
    %v1347 = vpack.c.b16 %v1328, %v1327
    %v1348 = vpack.c.b16 %v1330, %v1329
    %v1349 = vpack.c.b16 %v1332, %v1331
    %v1350 = vpack.c.b16 %v1334, %v1333
    %1367 = vmatpush.bf16.msra.mxu0 %v1342
    %1368 = vmatpush.bf16.msra.mxu0 %v1341
    %1369 = vmatpush.bf16.msra.mxu0 %v1340
    %1370 = vmatpush.bf16.msra.mxu0 %v1339
    %1371 = vmatpush.bf16.msra.mxu0 %v1338
    %1372 = vmatpush.bf16.msra.mxu0 %v1337
    %1373 = vmatpush.bf16.msra.mxu0 %v1336
    %1374 = vmatpush.bf16.msra.mxu0 %v1335
    %1375 = vmatmul.bf16.gmra.mxu0 %v1233
    %v1376 = vpop.f32.mrf.mxu0
    %v1377 = vadd.f32 %v1269, %v1376
    %v1378 = vpop.f32.mrf.mxu0
    %v1379 = vadd.f32 %v1269, %v1378
    %1380 = vdwg.mxu0
    %1381 = vmatpush.bf16.msra.mxu0 %v1350
    %1382 = vmatpush.bf16.msra.mxu0 %v1349
    %1383 = vmatpush.bf16.msra.mxu0 %v1348
    %1384 = vmatpush.bf16.msra.mxu0 %v1347
    %1385 = vmatpush.bf16.msra.mxu0 %v1346
    %1386 = vmatpush.bf16.msra.mxu0 %v1345
    %1387 = vmatpush.bf16.msra.mxu0 %v1344
    %1388 = vmatpush.bf16.msra.mxu0 %v1343
    %1389 = vmatmul.bf16.gmra.mxu0 %v1234
    %v1390 = vpop.f32.mrf.mxu0
    %v1391 = vadd.f32 %v1377, %v1390
    %v1392 = vpop.f32.mrf.mxu0
    %v1393 = vadd.f32 %v1379, %v1392
    %1394 = vdwg.mxu0
    %v1395 = vmul.f32 %v1391, 0.5
    %v1396 = vmul.f32 %v1393, 0.5
    %v1397 = vmul.f32 %v1395, 1.442695
    %v1398 = vpow.pop %v1397
    %v1399 = vmul.f32 %v1396, 1.442695
    %v1400 = vpow.pop %v1399
    %v1401 = vld [vmem:[#allocation5] sm:$0xff]
    %v1402 = vld [vmem:[#allocation5 + $0x8] sm:$0xff]
    %1405 = vrot.lane.b32.xlu0 %v1398, 96
    %v1406 = vpop.permute.xlu0 %1405
    %1407 = vrot.lane.b32.xlu0 %v1400, 96
    %v1408 = vpop.permute.xlu0 %1407
    %v1411 = vmul.f32 %v1401, %v1406
    %v1412 = vmul.f32 %v1402, %v1408
    %v1413 = vadd.f32 %v1391, %v1411
    %v1414 = vadd.f32 %v1393, %v1412
    %v1415 = vpack.c.bf16 %v1414, %v1413
    %v1416 = vld [vmem:[#allocation14] sm:$0xff]
    %v1417 = vld [vmem:[#allocation14 + $0x8] sm:$0xff]
    %v1418 = vld [vmem:[#allocation14 + $0x10] sm:$0xff]
    %v1419 = vld [vmem:[#allocation14 + $0x18] sm:$0xff]
    %v1420 = vld [vmem:[%s9] sm:$0x3]
    %v1422 = vperm.slane %v1420, 0
    %v1423 = vperm.slane %v1420, 1
    %v1430 = vunpack.c.l.b16 %v1416
    %v1431 = vunpack.c.h.b16 %v1416
    %v1432 = vunpack.c.l.b16 %v1417
    %v1433 = vunpack.c.h.b16 %v1417
    %v1434 = vunpack.c.l.b16 %v1418
    %v1435 = vunpack.c.h.b16 %v1418
    %v1436 = vunpack.c.l.b16 %v1419
    %v1437 = vunpack.c.h.b16 %v1419
    %v1438 = vpack.c.b16 %v1432, %v1430
    %v1439 = vpack.c.b16 %v1433, %v1431
    %v1440 = vpack.c.b16 %v1436, %v1434
    %v1441 = vpack.c.b16 %v1437, %v1435
    %vm1446 = vcmask 261120
    %v1448 = vsel %vm1446, %v1415, 0
    %1450 = vmatpush.bf16.msra.mxu0 0
    %1451 = vmatpush.bf16.msra.mxu0 0
    %1452 = vmatpush.bf16.msra.mxu0 0
    %1453 = vmatpush.bf16.msra.mxu0 0
    %1454 = vmatpush.bf16.msra.mxu0 0
    %1455 = vmatpush.bf16.msra.mxu0 0
    %1456 = vmatpush.bf16.msra.mxu0 %v1440
    %1457 = vmatpush.bf16.msra.mxu0 %v1438
    %1458 = vmatmul.bf16.gmra.mxu0 %v1448
    %v1459 = vpop.f32.mrf.mxu0
    %v1460 = vadd.f32 %v1422, %v1459
    %v1461 = vpop.f32.mrf.mxu0
    %v1462 = vadd.f32 %v1422, %v1461
    %1463 = vdwg.mxu0
    %1464 = vmatpush.bf16.msra.mxu0 0
    %1465 = vmatpush.bf16.msra.mxu0 0
    %1466 = vmatpush.bf16.msra.mxu0 0
    %1467 = vmatpush.bf16.msra.mxu0 0
    %1468 = vmatpush.bf16.msra.mxu0 0
    %1469 = vmatpush.bf16.msra.mxu0 0
    %1470 = vmatpush.bf16.msra.mxu0 %v1441
    %1471 = vmatpush.bf16.msra.mxu0 %v1439
    %1472 = vmatmul.bf16.gmra.mxu0 %v1448
    %v1473 = vpop.f32.mrf.mxu0
    %v1474 = vadd.f32 %v1423, %v1473
    %v1475 = vpop.f32.mrf.mxu0
    %v1476 = vadd.f32 %v1423, %v1475
    %1477 = vdwg.mxu0
    %v1478 = vmax.f32 %v1460, 0.0
    %v1479 = vmax.f32 %v1474, 0.0
    %v1480 = vmax.f32 %v1462, 0.0
    %v1481 = vmax.f32 %v1476, 0.0
    %v1482 = vpack.c.bf16 %v1480, %v1478
    %v1483 = vpack.c.bf16 %v1481, %v1479
    %v1484 = vld [vmem:[#allocation16] sm:$0xff]
    %v1485 = vld [vmem:[#allocation16 + $0x8] sm:$0xff]
    %v1486 = vld [vmem:[#allocation16 + $0x10] sm:$0xff]
    %v1487 = vld [vmem:[#allocation16 + $0x18] sm:$0xff]
    %v1488 = vld [vmem:[#allocation16 + $0x20] sm:$0xff]
    %v1489 = vld [vmem:[#allocation16 + $0x28] sm:$0xff]
    %v1490 = vld [vmem:[#allocation16 + $0x30] sm:$0xff]
    %v1491 = vld [vmem:[#allocation16 + $0x38] sm:$0xff]
    %v1492 = vld [vmem:[#allocation16 + $0x40] sm:$0xff]
    %v1493 = vld [vmem:[#allocation16 + $0x48] sm:$0xff]
    %v1494 = vld [vmem:[#allocation16 + $0x50] sm:$0xff]
    %v1495 = vld [vmem:[#allocation16 + $0x58] sm:$0xff]
    %v1496 = vld [vmem:[#allocation16 + $0x60] sm:$0xff]
    %v1497 = vld [vmem:[#allocation16 + $0x68] sm:$0xff]
    %v1498 = vld [vmem:[#allocation16 + $0x70] sm:$0xff]
    %v1499 = vld [vmem:[#allocation16 + $0x78] sm:$0xff]
    %v1500 = vld [vmem:[#allocation16 + $0x80] sm:$0xff]
    %v1501 = vld [vmem:[#allocation16 + $0x88] sm:$0xff]
    %v1502 = vld [vmem:[#allocation16 + $0x90] sm:$0xff]
    %v1503 = vld [vmem:[#allocation16 + $0x98] sm:$0xff]
    %v1504 = vld [vmem:[#allocation16 + $0xa0] sm:$0xff]
    %v1505 = vld [vmem:[#allocation16 + $0xa8] sm:$0xff]
    %v1506 = vld [vmem:[#allocation16 + $0xb0] sm:$0xff]
    %v1507 = vld [vmem:[#allocation16 + $0xb8] sm:$0xff]
    %v1508 = vld [vmem:[#allocation16 + $0xc0] sm:$0xff]
    %v1509 = vld [vmem:[#allocation16 + $0xc8] sm:$0xff]
    %v1510 = vld [vmem:[#allocation16 + $0xd0] sm:$0xff]
    %v1511 = vld [vmem:[#allocation16 + $0xd8] sm:$0xff]
    %v1512 = vld [vmem:[#allocation16 + $0xe0] sm:$0xff]
    %v1513 = vld [vmem:[#allocation16 + $0xe8] sm:$0xff]
    %v1514 = vld [vmem:[#allocation16 + $0xf0] sm:$0xff]
    %v1515 = vld [vmem:[#allocation16 + $0xf8] sm:$0xff]
    %v1516 = vld [vmem:[#allocation16 + $0x100] sm:$0xff]
    %v1517 = vld [vmem:[#allocation16 + $0x108] sm:$0xff]
    %v1518 = vld [vmem:[#allocation16 + $0x110] sm:$0xff]
    %v1519 = vld [vmem:[#allocation16 + $0x118] sm:$0xff]
    %v1520 = vld [vmem:[#allocation16 + $0x120] sm:$0xff]
    %v1521 = vld [vmem:[#allocation16 + $0x128] sm:$0xff]
    %v1522 = vld [vmem:[#allocation16 + $0x130] sm:$0xff]
    %v1523 = vld [vmem:[#allocation16 + $0x138] sm:$0xff]
    %v1524 = vld [vmem:[#allocation16 + $0x140] sm:$0xff]
    %v1525 = vld [vmem:[#allocation16 + $0x148] sm:$0xff]
    %v1526 = vld [vmem:[#allocation16 + $0x150] sm:$0xff]
    %v1527 = vld [vmem:[#allocation16 + $0x158] sm:$0xff]
    %v1528 = vld [vmem:[#allocation16 + $0x160] sm:$0xff]
    %v1529 = vld [vmem:[#allocation16 + $0x168] sm:$0xff]
    %v1530 = vld [vmem:[#allocation16 + $0x170] sm:$0xff]
    %v1531 = vld [vmem:[#allocation16 + $0x178] sm:$0xff]
    %v1532 = vld [vmem:[#allocation16 + $0x180] sm:$0xff]
    %v1533 = vld [vmem:[#allocation16 + $0x188] sm:$0xff]
    %v1534 = vld [vmem:[#allocation16 + $0x190] sm:$0xff]
    %v1535 = vld [vmem:[#allocation16 + $0x198] sm:$0xff]
    %v1536 = vld [vmem:[#allocation16 + $0x1a0] sm:$0xff]
    %v1537 = vld [vmem:[#allocation16 + $0x1a8] sm:$0xff]
    %v1538 = vld [vmem:[#allocation16 + $0x1b0] sm:$0xff]
    %v1539 = vld [vmem:[#allocation16 + $0x1b8] sm:$0xff]
    %v1540 = vld [vmem:[#allocation16 + $0x1c0] sm:$0xff]
    %v1541 = vld [vmem:[#allocation16 + $0x1c8] sm:$0xff]
    %v1542 = vld [vmem:[#allocation16 + $0x1d0] sm:$0xff]
    %v1543 = vld [vmem:[#allocation16 + $0x1d8] sm:$0xff]
    %v1544 = vld [vmem:[#allocation16 + $0x1e0] sm:$0xff]
    %v1545 = vld [vmem:[#allocation16 + $0x1e8] sm:$0xff]
    %v1546 = vld [vmem:[#allocation16 + $0x1f0] sm:$0xff]
    %v1547 = vld [vmem:[#allocation16 + $0x1f8] sm:$0xff]
    %v1548 = vld [vmem:[%s11] sm:$0xf]
    %v1550 = vperm.slane %v1548, 0
    %v1551 = vperm.slane %v1548, 1
    %v1552 = vperm.slane %v1548, 2
    %v1553 = vperm.slane %v1548, 3
    %v1622 = vunpack.c.l.b16 %v1484
    %v1623 = vunpack.c.h.b16 %v1484
    %v1624 = vunpack.c.l.b16 %v1485
    %v1625 = vunpack.c.h.b16 %v1485
    %v1626 = vunpack.c.l.b16 %v1486
    %v1627 = vunpack.c.h.b16 %v1486
    %v1628 = vunpack.c.l.b16 %v1487
    %v1629 = vunpack.c.h.b16 %v1487
    %v1630 = vunpack.c.l.b16 %v1488
    %v1631 = vunpack.c.h.b16 %v1488
    %v1632 = vunpack.c.l.b16 %v1489
    %v1633 = vunpack.c.h.b16 %v1489
    %v1634 = vunpack.c.l.b16 %v1490
    %v1635 = vunpack.c.h.b16 %v1490
    %v1636 = vunpack.c.l.b16 %v1491
    %v1637 = vunpack.c.h.b16 %v1491
    %v1638 = vunpack.c.l.b16 %v1492
    %v1639 = vunpack.c.h.b16 %v1492
    %v1640 = vunpack.c.l.b16 %v1493
    %v1641 = vunpack.c.h.b16 %v1493
    %v1642 = vunpack.c.l.b16 %v1494
    %v1643 = vunpack.c.h.b16 %v1494
    %v1644 = vunpack.c.l.b16 %v1495
    %v1645 = vunpack.c.h.b16 %v1495
    %v1646 = vunpack.c.l.b16 %v1496
    %v1647 = vunpack.c.h.b16 %v1496
    %v1648 = vunpack.c.l.b16 %v1497
    %v1649 = vunpack.c.h.b16 %v1497
    %v1650 = vunpack.c.l.b16 %v1498
    %v1651 = vunpack.c.h.b16 %v1498
    %v1652 = vunpack.c.l.b16 %v1499
    %v1653 = vunpack.c.h.b16 %v1499
    %v1654 = vunpack.c.l.b16 %v1500
    %v1655 = vunpack.c.h.b16 %v1500
    %v1656 = vunpack.c.l.b16 %v1501
    %v1657 = vunpack.c.h.b16 %v1501
    %v1658 = vunpack.c.l.b16 %v1502
    %v1659 = vunpack.c.h.b16 %v1502
    %v1660 = vunpack.c.l.b16 %v1503
    %v1661 = vunpack.c.h.b16 %v1503
    %v1662 = vunpack.c.l.b16 %v1504
    %v1663 = vunpack.c.h.b16 %v1504
    %v1664 = vunpack.c.l.b16 %v1505
    %v1665 = vunpack.c.h.b16 %v1505
    %v1666 = vunpack.c.l.b16 %v1506
    %v1667 = vunpack.c.h.b16 %v1506
    %v1668 = vunpack.c.l.b16 %v1507
    %v1669 = vunpack.c.h.b16 %v1507
    %v1670 = vunpack.c.l.b16 %v1508
    %v1671 = vunpack.c.h.b16 %v1508
    %v1672 = vunpack.c.l.b16 %v1509
    %v1673 = vunpack.c.h.b16 %v1509
    %v1674 = vunpack.c.l.b16 %v1510
    %v1675 = vunpack.c.h.b16 %v1510
    %v1676 = vunpack.c.l.b16 %v1511
    %v1677 = vunpack.c.h.b16 %v1511
    %v1678 = vunpack.c.l.b16 %v1512
    %v1679 = vunpack.c.h.b16 %v1512
    %v1680 = vunpack.c.l.b16 %v1513
    %v1681 = vunpack.c.h.b16 %v1513
    %v1682 = vunpack.c.l.b16 %v1514
    %v1683 = vunpack.c.h.b16 %v1514
    %v1684 = vunpack.c.l.b16 %v1515
    %v1685 = vunpack.c.h.b16 %v1515
    %v1686 = vunpack.c.l.b16 %v1516
    %v1687 = vunpack.c.h.b16 %v1516
    %v1688 = vunpack.c.l.b16 %v1517
    %v1689 = vunpack.c.h.b16 %v1517
    %v1690 = vunpack.c.l.b16 %v1518
    %v1691 = vunpack.c.h.b16 %v1518
    %v1692 = vunpack.c.l.b16 %v1519
    %v1693 = vunpack.c.h.b16 %v1519
    %v1694 = vunpack.c.l.b16 %v1520
    %v1695 = vunpack.c.h.b16 %v1520
    %v1696 = vunpack.c.l.b16 %v1521
    %v1697 = vunpack.c.h.b16 %v1521
    %v1698 = vunpack.c.l.b16 %v1522
    %v1699 = vunpack.c.h.b16 %v1522
    %v1700 = vunpack.c.l.b16 %v1523
    %v1701 = vunpack.c.h.b16 %v1523
    %v1702 = vunpack.c.l.b16 %v1524
    %v1703 = vunpack.c.h.b16 %v1524
    %v1704 = vunpack.c.l.b16 %v1525
    %v1705 = vunpack.c.h.b16 %v1525
    %v1706 = vunpack.c.l.b16 %v1526
    %v1707 = vunpack.c.h.b16 %v1526
    %v1708 = vunpack.c.l.b16 %v1527
    %v1709 = vunpack.c.h.b16 %v1527
    %v1710 = vunpack.c.l.b16 %v1528
    %v1711 = vunpack.c.h.b16 %v1528
    %v1712 = vunpack.c.l.b16 %v1529
    %v1713 = vunpack.c.h.b16 %v1529
    %v1714 = vunpack.c.l.b16 %v1530
    %v1715 = vunpack.c.h.b16 %v1530
    %v1716 = vunpack.c.l.b16 %v1531
    %v1717 = vunpack.c.h.b16 %v1531
    %v1718 = vunpack.c.l.b16 %v1532
    %v1719 = vunpack.c.h.b16 %v1532
    %v1720 = vunpack.c.l.b16 %v1533
    %v1721 = vunpack.c.h.b16 %v1533
    %v1722 = vunpack.c.l.b16 %v1534
    %v1723 = vunpack.c.h.b16 %v1534
    %v1724 = vunpack.c.l.b16 %v1535
    %v1725 = vunpack.c.h.b16 %v1535
    %v1726 = vunpack.c.l.b16 %v1536
    %v1727 = vunpack.c.h.b16 %v1536
    %v1728 = vunpack.c.l.b16 %v1537
    %v1729 = vunpack.c.h.b16 %v1537
    %v1730 = vunpack.c.l.b16 %v1538
    %v1731 = vunpack.c.h.b16 %v1538
    %v1732 = vunpack.c.l.b16 %v1539
    %v1733 = vunpack.c.h.b16 %v1539
    %v1734 = vunpack.c.l.b16 %v1540
    %v1735 = vunpack.c.h.b16 %v1540
    %v1736 = vunpack.c.l.b16 %v1541
    %v1737 = vunpack.c.h.b16 %v1541
    %v1738 = vunpack.c.l.b16 %v1542
    %v1739 = vunpack.c.h.b16 %v1542
    %v1740 = vunpack.c.l.b16 %v1543
    %v1741 = vunpack.c.h.b16 %v1543
    %v1742 = vunpack.c.l.b16 %v1544
    %v1743 = vunpack.c.h.b16 %v1544
    %v1744 = vunpack.c.l.b16 %v1545
    %v1745 = vunpack.c.h.b16 %v1545
    %v1746 = vunpack.c.l.b16 %v1546
    %v1747 = vunpack.c.h.b16 %v1546
    %v1748 = vunpack.c.l.b16 %v1547
    %v1749 = vunpack.c.h.b16 %v1547
    %v1750 = vpack.c.b16 %v1626, %v1622
    %v1751 = vpack.c.b16 %v1627, %v1623
    %v1752 = vpack.c.b16 %v1628, %v1624
    %v1753 = vpack.c.b16 %v1629, %v1625
    %v1754 = vpack.c.b16 %v1634, %v1630
    %v1755 = vpack.c.b16 %v1635, %v1631
    %v1756 = vpack.c.b16 %v1636, %v1632
    %v1757 = vpack.c.b16 %v1637, %v1633
    %v1758 = vpack.c.b16 %v1642, %v1638
    %v1759 = vpack.c.b16 %v1643, %v1639
    %v1760 = vpack.c.b16 %v1644, %v1640
    %v1761 = vpack.c.b16 %v1645, %v1641
    %v1762 = vpack.c.b16 %v1650, %v1646
    %v1763 = vpack.c.b16 %v1651, %v1647
    %v1764 = vpack.c.b16 %v1652, %v1648
    %v1765 = vpack.c.b16 %v1653, %v1649
    %v1766 = vpack.c.b16 %v1658, %v1654
    %v1767 = vpack.c.b16 %v1659, %v1655
    %v1768 = vpack.c.b16 %v1660, %v1656
    %v1769 = vpack.c.b16 %v1661, %v1657
    %v1770 = vpack.c.b16 %v1666, %v1662
    %v1771 = vpack.c.b16 %v1667, %v1663
    %v1772 = vpack.c.b16 %v1668, %v1664
    %v1773 = vpack.c.b16 %v1669, %v1665
    %v1774 = vpack.c.b16 %v1674, %v1670
    %v1775 = vpack.c.b16 %v1675, %v1671
    %v1776 = vpack.c.b16 %v1676, %v1672
    %v1777 = vpack.c.b16 %v1677, %v1673
    %v1778 = vpack.c.b16 %v1682, %v1678
    %v1779 = vpack.c.b16 %v1683, %v1679
    %v1780 = vpack.c.b16 %v1684, %v1680
    %v1781 = vpack.c.b16 %v1685, %v1681
    %v1782 = vpack.c.b16 %v1690, %v1686
    %v1783 = vpack.c.b16 %v1691, %v1687
    %v1784 = vpack.c.b16 %v1692, %v1688
    %v1785 = vpack.c.b16 %v1693, %v1689
    %v1786 = vpack.c.b16 %v1698, %v1694
    %v1787 = vpack.c.b16 %v1699, %v1695
    %v1788 = vpack.c.b16 %v1700, %v1696
    %v1789 = vpack.c.b16 %v1701, %v1697
    %v1790 = vpack.c.b16 %v1706, %v1702
    %v1791 = vpack.c.b16 %v1707, %v1703
    %v1792 = vpack.c.b16 %v1708, %v1704
    %v1793 = vpack.c.b16 %v1709, %v1705
    %v1794 = vpack.c.b16 %v1714, %v1710
    %v1795 = vpack.c.b16 %v1715, %v1711
    %v1796 = vpack.c.b16 %v1716, %v1712
    %v1797 = vpack.c.b16 %v1717, %v1713
    %v1798 = vpack.c.b16 %v1722, %v1718
    %v1799 = vpack.c.b16 %v1723, %v1719
    %v1800 = vpack.c.b16 %v1724, %v1720
    %v1801 = vpack.c.b16 %v1725, %v1721
    %v1802 = vpack.c.b16 %v1730, %v1726
    %v1803 = vpack.c.b16 %v1731, %v1727
    %v1804 = vpack.c.b16 %v1732, %v1728
    %v1805 = vpack.c.b16 %v1733, %v1729
    %v1806 = vpack.c.b16 %v1738, %v1734
    %v1807 = vpack.c.b16 %v1739, %v1735
    %v1808 = vpack.c.b16 %v1740, %v1736
    %v1809 = vpack.c.b16 %v1741, %v1737
    %v1810 = vpack.c.b16 %v1746, %v1742
    %v1811 = vpack.c.b16 %v1747, %v1743
    %v1812 = vpack.c.b16 %v1748, %v1744
    %v1813 = vpack.c.b16 %v1749, %v1745
    %1878 = vmatpush.bf16.msra.mxu0 %v1778
    %1879 = vmatpush.bf16.msra.mxu0 %v1774
    %1880 = vmatpush.bf16.msra.mxu0 %v1770
    %1881 = vmatpush.bf16.msra.mxu0 %v1766
    %1882 = vmatpush.bf16.msra.mxu0 %v1762
    %1883 = vmatpush.bf16.msra.mxu0 %v1758
    %1884 = vmatpush.bf16.msra.mxu0 %v1754
    %1885 = vmatpush.bf16.msra.mxu0 %v1750
    %1886 = vmatmul.bf16.gmra.mxu0 %v1482
    %v1887 = vpop.f32.mrf.mxu0
    %v1888 = vadd.f32 %v1550, %v1887
    %v1889 = vpop.f32.mrf.mxu0
    %v1890 = vadd.f32 %v1550, %v1889
    %1891 = vdwg.mxu0
    %1892 = vmatpush.bf16.msra.mxu0 %v1810
    %1893 = vmatpush.bf16.msra.mxu0 %v1806
    %1894 = vmatpush.bf16.msra.mxu0 %v1802
    %1895 = vmatpush.bf16.msra.mxu0 %v1798
    %1896 = vmatpush.bf16.msra.mxu0 %v1794
    %1897 = vmatpush.bf16.msra.mxu0 %v1790
    %1898 = vmatpush.bf16.msra.mxu0 %v1786
    %1899 = vmatpush.bf16.msra.mxu0 %v1782
    %1900 = vmatmul.bf16.gmra.mxu0 %v1483
    %v1901 = vpop.f32.mrf.mxu0
    %v1902 = vadd.f32 %v1888, %v1901
    %v1903 = vpop.f32.mrf.mxu0
    %v1904 = vadd.f32 %v1890, %v1903
    %1905 = vdwg.mxu0
    %1906 = vmatpush.bf16.msra.mxu0 %v1779
    %1907 = vmatpush.bf16.msra.mxu0 %v1775
    %1908 = vmatpush.bf16.msra.mxu0 %v1771
    %1909 = vmatpush.bf16.msra.mxu0 %v1767
    %1910 = vmatpush.bf16.msra.mxu0 %v1763
    %1911 = vmatpush.bf16.msra.mxu0 %v1759
    %1912 = vmatpush.bf16.msra.mxu0 %v1755
    %1913 = vmatpush.bf16.msra.mxu0 %v1751
    %1914 = vmatmul.bf16.gmra.mxu0 %v1482
    %v1915 = vpop.f32.mrf.mxu0
    %v1916 = vadd.f32 %v1551, %v1915
    %v1917 = vpop.f32.mrf.mxu0
    %v1918 = vadd.f32 %v1551, %v1917
    %1919 = vdwg.mxu0
    %1920 = vmatpush.bf16.msra.mxu0 %v1811
    %1921 = vmatpush.bf16.msra.mxu0 %v1807
    %1922 = vmatpush.bf16.msra.mxu0 %v1803
    %1923 = vmatpush.bf16.msra.mxu0 %v1799
    %1924 = vmatpush.bf16.msra.mxu0 %v1795
    %1925 = vmatpush.bf16.msra.mxu0 %v1791
    %1926 = vmatpush.bf16.msra.mxu0 %v1787
    %1927 = vmatpush.bf16.msra.mxu0 %v1783
    %1928 = vmatmul.bf16.gmra.mxu0 %v1483
    %v1929 = vpop.f32.mrf.mxu0
    %v1930 = vadd.f32 %v1916, %v1929
    %v1931 = vpop.f32.mrf.mxu0
    %v1932 = vadd.f32 %v1918, %v1931
    %1933 = vdwg.mxu0
    %1934 = vmatpush.bf16.msra.mxu0 %v1780
    %1935 = vmatpush.bf16.msra.mxu0 %v1776
    %1936 = vmatpush.bf16.msra.mxu0 %v1772
    %1937 = vmatpush.bf16.msra.mxu0 %v1768
    %1938 = vmatpush.bf16.msra.mxu0 %v1764
    %1939 = vmatpush.bf16.msra.mxu0 %v1760
    %1940 = vmatpush.bf16.msra.mxu0 %v1756
    %1941 = vmatpush.bf16.msra.mxu0 %v1752
    %1942 = vmatmul.bf16.gmra.mxu0 %v1482
    %v1943 = vpop.f32.mrf.mxu0
    %v1944 = vadd.f32 %v1552, %v1943
    %v1945 = vpop.f32.mrf.mxu0
    %v1946 = vadd.f32 %v1552, %v1945
    %1947 = vdwg.mxu0
    %1948 = vmatpush.bf16.msra.mxu0 %v1812
    %1949 = vmatpush.bf16.msra.mxu0 %v1808
    %1950 = vmatpush.bf16.msra.mxu0 %v1804
    %1951 = vmatpush.bf16.msra.mxu0 %v1800
    %1952 = vmatpush.bf16.msra.mxu0 %v1796
    %1953 = vmatpush.bf16.msra.mxu0 %v1792
    %1954 = vmatpush.bf16.msra.mxu0 %v1788
    %1955 = vmatpush.bf16.msra.mxu0 %v1784
    %1956 = vmatmul.bf16.gmra.mxu0 %v1483
    %v1957 = vpop.f32.mrf.mxu0
    %v1958 = vadd.f32 %v1944, %v1957
    %v1959 = vpop.f32.mrf.mxu0
    %v1960 = vadd.f32 %v1946, %v1959
    %1961 = vdwg.mxu0
    %1962 = vmatpush.bf16.msra.mxu0 %v1781
    %1963 = vmatpush.bf16.msra.mxu0 %v1777
    %1964 = vmatpush.bf16.msra.mxu0 %v1773
    %1965 = vmatpush.bf16.msra.mxu0 %v1769
    %1966 = vmatpush.bf16.msra.mxu0 %v1765
    %1967 = vmatpush.bf16.msra.mxu0 %v1761
    %1968 = vmatpush.bf16.msra.mxu0 %v1757
    %1969 = vmatpush.bf16.msra.mxu0 %v1753
    %1970 = vmatmul.bf16.gmra.mxu0 %v1482
    %v1971 = vpop.f32.mrf.mxu0
    %v1972 = vadd.f32 %v1553, %v1971
    %v1973 = vpop.f32.mrf.mxu0
    %v1974 = vadd.f32 %v1553, %v1973
    %1975 = vdwg.mxu0
    %1976 = vmatpush.bf16.msra.mxu0 %v1813
    %1977 = vmatpush.bf16.msra.mxu0 %v1809
    %1978 = vmatpush.bf16.msra.mxu0 %v1805
    %1979 = vmatpush.bf16.msra.mxu0 %v1801
    %1980 = vmatpush.bf16.msra.mxu0 %v1797
    %1981 = vmatpush.bf16.msra.mxu0 %v1793
    %1982 = vmatpush.bf16.msra.mxu0 %v1789
    %1983 = vmatpush.bf16.msra.mxu0 %v1785
    %1984 = vmatmul.bf16.gmra.mxu0 %v1483
    %v1985 = vpop.f32.mrf.mxu0
    %v1986 = vadd.f32 %v1972, %v1985
    %v1987 = vpop.f32.mrf.mxu0
    %v1988 = vadd.f32 %v1974, %v1987
    %1989 = vdwg.mxu0
    %v1990 = vmax.f32 %v1902, 0.0
    %v1991 = vmax.f32 %v1930, 0.0
    %v1992 = vmax.f32 %v1958, 0.0
    %v1993 = vmax.f32 %v1986, 0.0
    %v1994 = vmax.f32 %v1904, 0.0
    %v1995 = vmax.f32 %v1932, 0.0
    %v1996 = vmax.f32 %v1960, 0.0
    %v1997 = vmax.f32 %v1988, 0.0
    %v1998 = vpack.c.bf16 %v1994, %v1990
    %v1999 = vpack.c.bf16 %v1995, %v1991
    %v2000 = vpack.c.bf16 %v1996, %v1992
    %v2001 = vpack.c.bf16 %v1997, %v1993
    %v2002 = vld [vmem:[#allocation17] sm:$0xff]
    %v2003 = vld [vmem:[#allocation17 + $0x8] sm:$0xff]
    %v2004 = vld [vmem:[#allocation17 + $0x10] sm:$0xff]
    %v2005 = vld [vmem:[#allocation17 + $0x18] sm:$0xff]
    %v2006 = vld [vmem:[#allocation17 + $0x20] sm:$0xff]
    %v2007 = vld [vmem:[#allocation17 + $0x28] sm:$0xff]
    %v2008 = vld [vmem:[#allocation17 + $0x30] sm:$0xff]
    %v2009 = vld [vmem:[#allocation17 + $0x38] sm:$0xff]
    %v2010 = vld [vmem:[#allocation17 + $0x40] sm:$0xff]
    %v2011 = vld [vmem:[#allocation17 + $0x48] sm:$0xff]
    %v2012 = vld [vmem:[#allocation17 + $0x50] sm:$0xff]
    %v2013 = vld [vmem:[#allocation17 + $0x58] sm:$0xff]
    %v2014 = vld [vmem:[#allocation17 + $0x60] sm:$0xff]
    %v2015 = vld [vmem:[#allocation17 + $0x68] sm:$0xff]
    %v2016 = vld [vmem:[#allocation17 + $0x70] sm:$0xff]
    %v2017 = vld [vmem:[#allocation17 + $0x78] sm:$0xff]
    %v2018 = vld [vmem:[#allocation17 + $0x80] sm:$0xff]
    %v2019 = vld [vmem:[#allocation17 + $0x88] sm:$0xff]
    %v2020 = vld [vmem:[#allocation17 + $0x90] sm:$0xff]
    %v2021 = vld [vmem:[#allocation17 + $0x98] sm:$0xff]
    %v2022 = vld [vmem:[#allocation17 + $0xa0] sm:$0xff]
    %v2023 = vld [vmem:[#allocation17 + $0xa8] sm:$0xff]
    %v2024 = vld [vmem:[#allocation17 + $0xb0] sm:$0xff]
    %v2025 = vld [vmem:[#allocation17 + $0xb8] sm:$0xff]
    %v2026 = vld [vmem:[#allocation17 + $0xc0] sm:$0xff]
    %v2027 = vld [vmem:[#allocation17 + $0xc8] sm:$0xff]
    %v2028 = vld [vmem:[#allocation17 + $0xd0] sm:$0xff]
    %v2029 = vld [vmem:[#allocation17 + $0xd8] sm:$0xff]
    %v2030 = vld [vmem:[#allocation17 + $0xe0] sm:$0xff]
    %v2031 = vld [vmem:[#allocation17 + $0xe8] sm:$0xff]
    %v2032 = vld [vmem:[#allocation17 + $0xf0] sm:$0xff]
    %v2033 = vld [vmem:[#allocation17 + $0xf8] sm:$0xff]
    %v2034 = vld [vmem:[#allocation17 + $0x100] sm:$0xff]
    %v2035 = vld [vmem:[#allocation17 + $0x108] sm:$0xff]
    %v2036 = vld [vmem:[#allocation17 + $0x110] sm:$0xff]
    %v2037 = vld [vmem:[#allocation17 + $0x118] sm:$0xff]
    %v2038 = vld [vmem:[#allocation17 + $0x120] sm:$0xff]
    %v2039 = vld [vmem:[#allocation17 + $0x128] sm:$0xff]
    %v2040 = vld [vmem:[#allocation17 + $0x130] sm:$0xff]
    %v2041 = vld [vmem:[#allocation17 + $0x138] sm:$0xff]
    %v2042 = vld [vmem:[#allocation17 + $0x140] sm:$0xff]
    %v2043 = vld [vmem:[#allocation17 + $0x148] sm:$0xff]
    %v2044 = vld [vmem:[#allocation17 + $0x150] sm:$0xff]
    %v2045 = vld [vmem:[#allocation17 + $0x158] sm:$0xff]
    %v2046 = vld [vmem:[#allocation17 + $0x160] sm:$0xff]
    %v2047 = vld [vmem:[#allocation17 + $0x168] sm:$0xff]
    %v2048 = vld [vmem:[#allocation17 + $0x170] sm:$0xff]
    %v2049 = vld [vmem:[#allocation17 + $0x178] sm:$0xff]
    %v2050 = vld [vmem:[#allocation17 + $0x180] sm:$0xff]
    %v2051 = vld [vmem:[#allocation17 + $0x188] sm:$0xff]
    %v2052 = vld [vmem:[#allocation17 + $0x190] sm:$0xff]
    %v2053 = vld [vmem:[#allocation17 + $0x198] sm:$0xff]
    %v2054 = vld [vmem:[#allocation17 + $0x1a0] sm:$0xff]
    %v2055 = vld [vmem:[#allocation17 + $0x1a8] sm:$0xff]
    %v2056 = vld [vmem:[#allocation17 + $0x1b0] sm:$0xff]
    %v2057 = vld [vmem:[#allocation17 + $0x1b8] sm:$0xff]
    %v2058 = vld [vmem:[#allocation17 + $0x1c0] sm:$0xff]
    %v2059 = vld [vmem:[#allocation17 + $0x1c8] sm:$0xff]
    %v2060 = vld [vmem:[#allocation17 + $0x1d0] sm:$0xff]
    %v2061 = vld [vmem:[#allocation17 + $0x1d8] sm:$0xff]
    %v2062 = vld [vmem:[#allocation17 + $0x1e0] sm:$0xff]
    %v2063 = vld [vmem:[#allocation17 + $0x1e8] sm:$0xff]
    %v2064 = vld [vmem:[#allocation17 + $0x1f0] sm:$0xff]
    %v2065 = vld [vmem:[#allocation17 + $0x1f8] sm:$0xff]
    %v2066 = vld [vmem:[%s13] sm:$0x3]
    %v2068 = vperm.slane %v2066, 0
    %v2069 = vperm.slane %v2066, 1
    %v2136 = vunpack.c.l.b16 %v2002
    %v2137 = vunpack.c.h.b16 %v2002
    %v2138 = vunpack.c.l.b16 %v2003
    %v2139 = vunpack.c.h.b16 %v2003
    %v2140 = vunpack.c.l.b16 %v2004
    %v2141 = vunpack.c.h.b16 %v2004
    %v2142 = vunpack.c.l.b16 %v2005
    %v2143 = vunpack.c.h.b16 %v2005
    %v2144 = vunpack.c.l.b16 %v2006
    %v2145 = vunpack.c.h.b16 %v2006
    %v2146 = vunpack.c.l.b16 %v2007
    %v2147 = vunpack.c.h.b16 %v2007
    %v2148 = vunpack.c.l.b16 %v2008
    %v2149 = vunpack.c.h.b16 %v2008
    %v2150 = vunpack.c.l.b16 %v2009
    %v2151 = vunpack.c.h.b16 %v2009
    %v2152 = vunpack.c.l.b16 %v2010
    %v2153 = vunpack.c.h.b16 %v2010
    %v2154 = vunpack.c.l.b16 %v2011
    %v2155 = vunpack.c.h.b16 %v2011
    %v2156 = vunpack.c.l.b16 %v2012
    %v2157 = vunpack.c.h.b16 %v2012
    %v2158 = vunpack.c.l.b16 %v2013
    %v2159 = vunpack.c.h.b16 %v2013
    %v2160 = vunpack.c.l.b16 %v2014
    %v2161 = vunpack.c.h.b16 %v2014
    %v2162 = vunpack.c.l.b16 %v2015
    %v2163 = vunpack.c.h.b16 %v2015
    %v2164 = vunpack.c.l.b16 %v2016
    %v2165 = vunpack.c.h.b16 %v2016
    %v2166 = vunpack.c.l.b16 %v2017
    %v2167 = vunpack.c.h.b16 %v2017
    %v2168 = vunpack.c.l.b16 %v2018
    %v2169 = vunpack.c.h.b16 %v2018
    %v2170 = vunpack.c.l.b16 %v2019
    %v2171 = vunpack.c.h.b16 %v2019
    %v2172 = vunpack.c.l.b16 %v2020
    %v2173 = vunpack.c.h.b16 %v2020
    %v2174 = vunpack.c.l.b16 %v2021
    %v2175 = vunpack.c.h.b16 %v2021
    %v2176 = vunpack.c.l.b16 %v2022
    %v2177 = vunpack.c.h.b16 %v2022
    %v2178 = vunpack.c.l.b16 %v2023
    %v2179 = vunpack.c.h.b16 %v2023
    %v2180 = vunpack.c.l.b16 %v2024
    %v2181 = vunpack.c.h.b16 %v2024
    %v2182 = vunpack.c.l.b16 %v2025
    %v2183 = vunpack.c.h.b16 %v2025
    %v2184 = vunpack.c.l.b16 %v2026
    %v2185 = vunpack.c.h.b16 %v2026
    %v2186 = vunpack.c.l.b16 %v2027
    %v2187 = vunpack.c.h.b16 %v2027
    %v2188 = vunpack.c.l.b16 %v2028
    %v2189 = vunpack.c.h.b16 %v2028
    %v2190 = vunpack.c.l.b16 %v2029
    %v2191 = vunpack.c.h.b16 %v2029
    %v2192 = vunpack.c.l.b16 %v2030
    %v2193 = vunpack.c.h.b16 %v2030
    %v2194 = vunpack.c.l.b16 %v2031
    %v2195 = vunpack.c.h.b16 %v2031
    %v2196 = vunpack.c.l.b16 %v2032
    %v2197 = vunpack.c.h.b16 %v2032
    %v2198 = vunpack.c.l.b16 %v2033
    %v2199 = vunpack.c.h.b16 %v2033
    %v2200 = vunpack.c.l.b16 %v2034
    %v2201 = vunpack.c.h.b16 %v2034
    %v2202 = vunpack.c.l.b16 %v2035
    %v2203 = vunpack.c.h.b16 %v2035
    %v2204 = vunpack.c.l.b16 %v2036
    %v2205 = vunpack.c.h.b16 %v2036
    %v2206 = vunpack.c.l.b16 %v2037
    %v2207 = vunpack.c.h.b16 %v2037
    %v2208 = vunpack.c.l.b16 %v2038
    %v2209 = vunpack.c.h.b16 %v2038
    %v2210 = vunpack.c.l.b16 %v2039
    %v2211 = vunpack.c.h.b16 %v2039
    %v2212 = vunpack.c.l.b16 %v2040
    %v2213 = vunpack.c.h.b16 %v2040
    %v2214 = vunpack.c.l.b16 %v2041
    %v2215 = vunpack.c.h.b16 %v2041
    %v2216 = vunpack.c.l.b16 %v2042
    %v2217 = vunpack.c.h.b16 %v2042
    %v2218 = vunpack.c.l.b16 %v2043
    %v2219 = vunpack.c.h.b16 %v2043
    %v2220 = vunpack.c.l.b16 %v2044
    %v2221 = vunpack.c.h.b16 %v2044
    %v2222 = vunpack.c.l.b16 %v2045
    %v2223 = vunpack.c.h.b16 %v2045
    %v2224 = vunpack.c.l.b16 %v2046
    %v2225 = vunpack.c.h.b16 %v2046
    %v2226 = vunpack.c.l.b16 %v2047
    %v2227 = vunpack.c.h.b16 %v2047
    %v2228 = vunpack.c.l.b16 %v2048
    %v2229 = vunpack.c.h.b16 %v2048
    %v2230 = vunpack.c.l.b16 %v2049
    %v2231 = vunpack.c.h.b16 %v2049
    %v2232 = vunpack.c.l.b16 %v2050
    %v2233 = vunpack.c.h.b16 %v2050
    %v2234 = vunpack.c.l.b16 %v2051
    %v2235 = vunpack.c.h.b16 %v2051
    %v2236 = vunpack.c.l.b16 %v2052
    %v2237 = vunpack.c.h.b16 %v2052
    %v2238 = vunpack.c.l.b16 %v2053
    %v2239 = vunpack.c.h.b16 %v2053
    %v2240 = vunpack.c.l.b16 %v2054
    %v2241 = vunpack.c.h.b16 %v2054
    %v2242 = vunpack.c.l.b16 %v2055
    %v2243 = vunpack.c.h.b16 %v2055
    %v2244 = vunpack.c.l.b16 %v2056
    %v2245 = vunpack.c.h.b16 %v2056
    %v2246 = vunpack.c.l.b16 %v2057
    %v2247 = vunpack.c.h.b16 %v2057
    %v2248 = vunpack.c.l.b16 %v2058
    %v2249 = vunpack.c.h.b16 %v2058
    %v2250 = vunpack.c.l.b16 %v2059
    %v2251 = vunpack.c.h.b16 %v2059
    %v2252 = vunpack.c.l.b16 %v2060
    %v2253 = vunpack.c.h.b16 %v2060
    %v2254 = vunpack.c.l.b16 %v2061
    %v2255 = vunpack.c.h.b16 %v2061
    %v2256 = vunpack.c.l.b16 %v2062
    %v2257 = vunpack.c.h.b16 %v2062
    %v2258 = vunpack.c.l.b16 %v2063
    %v2259 = vunpack.c.h.b16 %v2063
    %v2260 = vunpack.c.l.b16 %v2064
    %v2261 = vunpack.c.h.b16 %v2064
    %v2262 = vunpack.c.l.b16 %v2065
    %v2263 = vunpack.c.h.b16 %v2065
    %v2264 = vpack.c.b16 %v2138, %v2136
    %v2265 = vpack.c.b16 %v2139, %v2137
    %v2266 = vpack.c.b16 %v2142, %v2140
    %v2267 = vpack.c.b16 %v2143, %v2141
    %v2268 = vpack.c.b16 %v2146, %v2144
    %v2269 = vpack.c.b16 %v2147, %v2145
    %v2270 = vpack.c.b16 %v2150, %v2148
    %v2271 = vpack.c.b16 %v2151, %v2149
    %v2272 = vpack.c.b16 %v2154, %v2152
    %v2273 = vpack.c.b16 %v2155, %v2153
    %v2274 = vpack.c.b16 %v2158, %v2156
    %v2275 = vpack.c.b16 %v2159, %v2157
    %v2276 = vpack.c.b16 %v2162, %v2160
    %v2277 = vpack.c.b16 %v2163, %v2161
    %v2278 = vpack.c.b16 %v2166, %v2164
    %v2279 = vpack.c.b16 %v2167, %v2165
    %v2280 = vpack.c.b16 %v2170, %v2168
    %v2281 = vpack.c.b16 %v2171, %v2169
    %v2282 = vpack.c.b16 %v2174, %v2172
    %v2283 = vpack.c.b16 %v2175, %v2173
    %v2284 = vpack.c.b16 %v2178, %v2176
    %v2285 = vpack.c.b16 %v2179, %v2177
    %v2286 = vpack.c.b16 %v2182, %v2180
    %v2287 = vpack.c.b16 %v2183, %v2181
    %v2288 = vpack.c.b16 %v2186, %v2184
    %v2289 = vpack.c.b16 %v2187, %v2185
    %v2290 = vpack.c.b16 %v2190, %v2188
    %v2291 = vpack.c.b16 %v2191, %v2189
    %v2292 = vpack.c.b16 %v2194, %v2192
    %v2293 = vpack.c.b16 %v2195, %v2193
    %v2294 = vpack.c.b16 %v2198, %v2196
    %v2295 = vpack.c.b16 %v2199, %v2197
    %v2296 = vpack.c.b16 %v2202, %v2200
    %v2297 = vpack.c.b16 %v2203, %v2201
    %v2298 = vpack.c.b16 %v2206, %v2204
    %v2299 = vpack.c.b16 %v2207, %v2205
    %v2300 = vpack.c.b16 %v2210, %v2208
    %v2301 = vpack.c.b16 %v2211, %v2209
    %v2302 = vpack.c.b16 %v2214, %v2212
    %v2303 = vpack.c.b16 %v2215, %v2213
    %v2304 = vpack.c.b16 %v2218, %v2216
    %v2305 = vpack.c.b16 %v2219, %v2217
    %v2306 = vpack.c.b16 %v2222, %v2220
    %v2307 = vpack.c.b16 %v2223, %v2221
    %v2308 = vpack.c.b16 %v2226, %v2224
    %v2309 = vpack.c.b16 %v2227, %v2225
    %v2310 = vpack.c.b16 %v2230, %v2228
    %v2311 = vpack.c.b16 %v2231, %v2229
    %v2312 = vpack.c.b16 %v2234, %v2232
    %v2313 = vpack.c.b16 %v2235, %v2233
    %v2314 = vpack.c.b16 %v2238, %v2236
    %v2315 = vpack.c.b16 %v2239, %v2237
    %v2316 = vpack.c.b16 %v2242, %v2240
    %v2317 = vpack.c.b16 %v2243, %v2241
    %v2318 = vpack.c.b16 %v2246, %v2244
    %v2319 = vpack.c.b16 %v2247, %v2245
    %v2320 = vpack.c.b16 %v2250, %v2248
    %v2321 = vpack.c.b16 %v2251, %v2249
    %v2322 = vpack.c.b16 %v2254, %v2252
    %v2323 = vpack.c.b16 %v2255, %v2253
    %v2324 = vpack.c.b16 %v2258, %v2256
    %v2325 = vpack.c.b16 %v2259, %v2257
    %v2326 = vpack.c.b16 %v2262, %v2260
    %v2327 = vpack.c.b16 %v2263, %v2261
    %2392 = vmatpush.bf16.msra.mxu0 %v2278
    %2393 = vmatpush.bf16.msra.mxu0 %v2276
    %2394 = vmatpush.bf16.msra.mxu0 %v2274
    %2395 = vmatpush.bf16.msra.mxu0 %v2272
    %2396 = vmatpush.bf16.msra.mxu0 %v2270
    %2397 = vmatpush.bf16.msra.mxu0 %v2268
    %2398 = vmatpush.bf16.msra.mxu0 %v2266
    %2399 = vmatpush.bf16.msra.mxu0 %v2264
    %2400 = vmatmul.bf16.gmra.mxu0 %v1998
    %v2401 = vpop.f32.mrf.mxu0
    %v2402 = vadd.f32 %v2068, %v2401
    %v2403 = vpop.f32.mrf.mxu0
    %v2404 = vadd.f32 %v2068, %v2403
    %2405 = vdwg.mxu0
    %2406 = vmatpush.bf16.msra.mxu0 %v2294
    %2407 = vmatpush.bf16.msra.mxu0 %v2292
    %2408 = vmatpush.bf16.msra.mxu0 %v2290
    %2409 = vmatpush.bf16.msra.mxu0 %v2288
    %2410 = vmatpush.bf16.msra.mxu0 %v2286
    %2411 = vmatpush.bf16.msra.mxu0 %v2284
    %2412 = vmatpush.bf16.msra.mxu0 %v2282
    %2413 = vmatpush.bf16.msra.mxu0 %v2280
    %2414 = vmatmul.bf16.gmra.mxu0 %v1999
    %v2415 = vpop.f32.mrf.mxu0
    %v2416 = vadd.f32 %v2402, %v2415
    %v2417 = vpop.f32.mrf.mxu0
    %v2418 = vadd.f32 %v2404, %v2417
    %2419 = vdwg.mxu0
    %2420 = vmatpush.bf16.msra.mxu0 %v2310
    %2421 = vmatpush.bf16.msra.mxu0 %v2308
    %2422 = vmatpush.bf16.msra.mxu0 %v2306
    %2423 = vmatpush.bf16.msra.mxu0 %v2304
    %2424 = vmatpush.bf16.msra.mxu0 %v2302
    %2425 = vmatpush.bf16.msra.mxu0 %v2300
    %2426 = vmatpush.bf16.msra.mxu0 %v2298
    %2427 = vmatpush.bf16.msra.mxu0 %v2296
    %2428 = vmatmul.bf16.gmra.mxu0 %v2000
    %v2429 = vpop.f32.mrf.mxu0
    %v2430 = vadd.f32 %v2416, %v2429
    %v2431 = vpop.f32.mrf.mxu0
    %v2432 = vadd.f32 %v2418, %v2431
    %2433 = vdwg.mxu0
    %2434 = vmatpush.bf16.msra.mxu0 %v2326
    %2435 = vmatpush.bf16.msra.mxu0 %v2324
    %2436 = vmatpush.bf16.msra.mxu0 %v2322
    %2437 = vmatpush.bf16.msra.mxu0 %v2320
    %2438 = vmatpush.bf16.msra.mxu0 %v2318
    %2439 = vmatpush.bf16.msra.mxu0 %v2316
    %2440 = vmatpush.bf16.msra.mxu0 %v2314
    %2441 = vmatpush.bf16.msra.mxu0 %v2312
    %2442 = vmatmul.bf16.gmra.mxu0 %v2001
    %v2443 = vpop.f32.mrf.mxu0
    %v2444 = vadd.f32 %v2430, %v2443
    %v2445 = vpop.f32.mrf.mxu0
    %v2446 = vadd.f32 %v2432, %v2445
    %2447 = vdwg.mxu0
    %2448 = vmatpush.bf16.msra.mxu0 %v2279
    %2449 = vmatpush.bf16.msra.mxu0 %v2277
    %2450 = vmatpush.bf16.msra.mxu0 %v2275
    %2451 = vmatpush.bf16.msra.mxu0 %v2273
    %2452 = vmatpush.bf16.msra.mxu0 %v2271
    %2453 = vmatpush.bf16.msra.mxu0 %v2269
    %2454 = vmatpush.bf16.msra.mxu0 %v2267
    %2455 = vmatpush.bf16.msra.mxu0 %v2265
    %2456 = vmatmul.bf16.gmra.mxu0 %v1998
    %v2457 = vpop.f32.mrf.mxu0
    %v2458 = vadd.f32 %v2069, %v2457
    %v2459 = vpop.f32.mrf.mxu0
    %v2460 = vadd.f32 %v2069, %v2459
    %2461 = vdwg.mxu0
    %2462 = vmatpush.bf16.msra.mxu0 %v2295
    %2463 = vmatpush.bf16.msra.mxu0 %v2293
    %2464 = vmatpush.bf16.msra.mxu0 %v2291
    %2465 = vmatpush.bf16.msra.mxu0 %v2289
    %2466 = vmatpush.bf16.msra.mxu0 %v2287
    %2467 = vmatpush.bf16.msra.mxu0 %v2285
    %2468 = vmatpush.bf16.msra.mxu0 %v2283
    %2469 = vmatpush.bf16.msra.mxu0 %v2281
    %2470 = vmatmul.bf16.gmra.mxu0 %v1999
    %v2471 = vpop.f32.mrf.mxu0
    %v2472 = vadd.f32 %v2458, %v2471
    %v2473 = vpop.f32.mrf.mxu0
    %v2474 = vadd.f32 %v2460, %v2473
    %2475 = vdwg.mxu0
    %2476 = vmatpush.bf16.msra.mxu0 %v2311
    %2477 = vmatpush.bf16.msra.mxu0 %v2309
    %2478 = vmatpush.bf16.msra.mxu0 %v2307
    %2479 = vmatpush.bf16.msra.mxu0 %v2305
    %2480 = vmatpush.bf16.msra.mxu0 %v2303
    %2481 = vmatpush.bf16.msra.mxu0 %v2301
    %2482 = vmatpush.bf16.msra.mxu0 %v2299
    %2483 = vmatpush.bf16.msra.mxu0 %v2297
    %2484 = vmatmul.bf16.gmra.mxu0 %v2000
    %v2485 = vpop.f32.mrf.mxu0
    %v2486 = vadd.f32 %v2472, %v2485
    %v2487 = vpop.f32.mrf.mxu0
    %v2488 = vadd.f32 %v2474, %v2487
    %2489 = vdwg.mxu0
    %2490 = vmatpush.bf16.msra.mxu0 %v2327
    %2491 = vmatpush.bf16.msra.mxu0 %v2325
    %2492 = vmatpush.bf16.msra.mxu0 %v2323
    %2493 = vmatpush.bf16.msra.mxu0 %v2321
    %2494 = vmatpush.bf16.msra.mxu0 %v2319
    %2495 = vmatpush.bf16.msra.mxu0 %v2317
    %2496 = vmatpush.bf16.msra.mxu0 %v2315
    %2497 = vmatpush.bf16.msra.mxu0 %v2313
    %2498 = vmatmul.bf16.gmra.mxu0 %v2001
    %v2499 = vpop.f32.mrf.mxu0
    %v2500 = vadd.f32 %v2486, %v2499
    %v2501 = vpop.f32.mrf.mxu0
    %v2502 = vadd.f32 %v2488, %v2501
    %2503 = vdwg.mxu0
    %v2504 = vxor.u32 %v2444, 2147483648
    %v2505 = vxor.u32 %v2500, 2147483648
    %v2506 = vxor.u32 %v2446, 2147483648
    %v2507 = vxor.u32 %v2502, 2147483648
    %v2508 = vmul.f32 %v2504, 1.442695
    %v2509 = vpow.pop %v2508
    %v2510 = vmul.f32 %v2505, 1.442695
    %v2511 = vpow.pop %v2510
    %v2512 = vmul.f32 %v2506, 1.442695
    %v2513 = vpow.pop %v2512
    %v2514 = vmul.f32 %v2507, 1.442695
    %v2515 = vpow.pop %v2514
    %v2516 = vadd.f32 %v2509, 1.0
    %v2517 = vadd.f32 %v2511, 1.0
    %v2518 = vadd.f32 %v2513, 1.0
    %v2519 = vadd.f32 %v2515, 1.0
    %v2520 = vrcp.pop %v2516
    %v2521 = vmul.f32 %v2516, %v2520
    %v2522 = vsub.f32 1.0, %v2521
    %v2523 = vmul.f32 %v2520, %v2522
    %v2524 = vadd.f32 %v2520, %v2523
    %vm2525 = vweird.f32 %v2516
    %vm2526 = vweird.f32 %v2520
    %vm2527 = vmor %vm2525, %vm2526
    %v2528 = vsel %vm2527, %v2520, %v2524
    %v2529 = vand.u32 2147483647, %v2516
    %vm2530 = vcmp.eq.f32.partialorder %v2529, 8.507059e+37
    %v2531 = vand.u32 %v2516, 2147483648
    %v2532 = vor.u32 1.1754944e-38, %v2531
    %v2533 = vsel %vm2530, %v2532, %v2528
    %v2534 = vmul.f32 1.0, %v2533
    %v2535 = vrcp.pop %v2517
    %v2536 = vmul.f32 %v2517, %v2535
    %v2537 = vsub.f32 1.0, %v2536
    %v2538 = vmul.f32 %v2535, %v2537
    %v2539 = vadd.f32 %v2535, %v2538
    %vm2540 = vweird.f32 %v2517
    %vm2541 = vweird.f32 %v2535
    %vm2542 = vmor %vm2540, %vm2541
    %v2543 = vsel %vm2542, %v2535, %v2539
    %v2544 = vand.u32 2147483647, %v2517
    %vm2545 = vcmp.eq.f32.partialorder %v2544, 8.507059e+37
    %v2546 = vand.u32 %v2517, 2147483648
    %v2547 = vor.u32 1.1754944e-38, %v2546
    %v2548 = vsel %vm2545, %v2547, %v2543
    %v2549 = vmul.f32 1.0, %v2548
    %v2550 = vrcp.pop %v2518
    %v2551 = vmul.f32 %v2518, %v2550
    %v2552 = vsub.f32 1.0, %v2551
    %v2553 = vmul.f32 %v2550, %v2552
    %v2554 = vadd.f32 %v2550, %v2553
    %vm2555 = vweird.f32 %v2518
    %vm2556 = vweird.f32 %v2550
    %vm2557 = vmor %vm2555, %vm2556
    %v2558 = vsel %vm2557, %v2550, %v2554
    %v2559 = vand.u32 2147483647, %v2518
    %vm2560 = vcmp.eq.f32.partialorder %v2559, 8.507059e+37
    %v2561 = vand.u32 %v2518, 2147483648
    %v2562 = vor.u32 1.1754944e-38, %v2561
    %v2563 = vsel %vm2560, %v2562, %v2558
    %v2564 = vmul.f32 1.0, %v2563
    %v2565 = vrcp.pop %v2519
    %v2566 = vmul.f32 %v2519, %v2565
    %v2567 = vsub.f32 1.0, %v2566
    %v2568 = vmul.f32 %v2565, %v2567
    %v2569 = vadd.f32 %v2565, %v2568
    %vm2570 = vweird.f32 %v2519
    %vm2571 = vweird.f32 %v2565
    %vm2572 = vmor %vm2570, %vm2571
    %v2573 = vsel %vm2572, %v2565, %v2569
    %v2574 = vand.u32 2147483647, %v2519
    %vm2575 = vcmp.eq.f32.partialorder %v2574, 8.507059e+37
    %v2576 = vand.u32 %v2519, 2147483648
    %v2577 = vor.u32 1.1754944e-38, %v2576
    %v2578 = vsel %vm2575, %v2577, %v2573
    %v2579 = vmul.f32 1.0, %v2578
    %2580 = vst [vmem:[#allocation19] sm:$0xff] %v2534
    %2581 = vst [vmem:[#allocation19 + $0x8] sm:$0xff] %v2549
    %2582 = vst [vmem:[#allocation19 + $0x10] sm:$0xff] %v2564
    %2583 = vst [vmem:[#allocation19 + $0x18] sm:$0xff] %v2579
    %2584 = vst [vmem:[%s15] sm:$0xff] %v1391
    %2585 = vst [vmem:[%s15 + $0x8] sm:$0xff] %v1393
    // Predicated region
    $region98: #{vae_forward.1} parent=1 // pred_check
      _
    $region99: #{vae_forward.1} parent=1 // pred_check_branch
      %2587 = sbr.rel (0) target = $region101
    $region100: #{vae_forward.1} parent=1 // pred_region
      %2589 = vsyncadd [#allocation4], 0
      %s2590 = sshll.u32 [#allocation19], 4
      %s2591 = int_to_ptr.vmem [resolvable:$true] %s2590
      %s2592 = sshll.u32 %s14, 4
      %s2593 = int_to_ptr.hbm [resolvable:$true] %s2592
      %2598 = dma.vmem_to_hbm [thread:$0]  %s2591, 512, %s2593, [#allocation4], 256, 256, 16
    $region101: #{vae_forward.1} parent=1 // pred_fallthru
      _
    // Predicated region
    $region102: #{vae_forward.1} parent=1 // pred_check
      _
    $region103: #{vae_forward.1} parent=1 // pred_check_branch
      %2600 = sbr.rel (0) target = $region105
    $region104: #{vae_forward.1} parent=1 // pred_region
      _
    $region105: #{vae_forward.1} parent=1 // pred_fallthru
      _
    // Predicated region
    $region106: #{vae_forward.1} parent=1 // pred_check
      _
    $region107: #{vae_forward.1} parent=1 // pred_check_branch
      %2602 = sbr.rel (0) target = $region109
    $region108: #{vae_forward.1} parent=1 // pred_region
      %2604 = dma.done [#allocation4], 512
    $region109: #{vae_forward.1} parent=1 // pred_fallthru
      _
    // Predicated region
    $region110: #{vae_forward.1} parent=1 // pred_check
      _
    $region111: #{vae_forward.1} parent=1 // pred_check_branch
      %2606 = sbr.rel (0) target = $region113
    $region112: #{vae_forward.1} parent=1 // pred_region
      _
    $region113: #{vae_forward.1} parent=1 // pred_fallthru
      _
    %2607 = vsyncpa [#allocation3], 1
    %2608 = vsyncpa [#allocation6], 1
    %2609 = vsyncpa [#allocation9], 1
    %2610 = vsyncpa [#allocation12], 1
    %2611 = vsyncpa [#allocation15], 1
    %2612 = vsyncpa [#allocation18], 1
    %2613 = vsyncpa [#allocation4], 1

</llo_original>
